<compile_context>
chip_gen: v7x
topology: tpu7x:2x2x1
jax: 0.10.0
libtpu: 0.0.40
codegen_flags: <defaults>
</compile_context>

<pallas_src>
import functools

import jax
import jax.numpy as jnp
from jax.experimental import pallas as pl
from jax.experimental.pallas import tpu as pltpu

F_PAD = 8   # zero-padded feature dim (layer-0 LSTM input / scalar block), f32 sublane min
B_TILE = 8  # batch rows padded to the f32 sublane count


def _round_up(n, m):
    return ((n + m - 1) // m) * m


def embedding_kernel(num_layers, hidden, T, B_pad, x_ref, sc_ref, *rest):
    # rest layout:
    #   [w_ihT_0, w_hhT_0, b_0, ..., w_ihT_{L-1}, w_hhT_{L-1}, b_{L-1},
    #    wd_pad, w_scalar, bias_all, out_ref]
    H = hidden
    n_lstm = 3 * num_layers
    lstm_refs = rest[:n_lstm]
    wd_ref, wsc_ref, ball_ref, out_ref = rest[n_lstm:n_lstm + 4]

    in_seq = x_ref[...]                                   # (T*B_pad, F_PAD) f32
    h = None
    for layer in range(num_layers):
        w_ih_t = lstm_refs[3 * layer][...]                # (K_in, 4H) f32 / bf16, gate-prescaled
        w_hh_t = lstm_refs[3 * layer + 1][...]            # (H, 4H) bf16, gate-prescaled
        bias = lstm_refs[3 * layer + 2][...]              # (1, 4H) f32, gate-prescaled

        # Hoisted input projection: one matmul for all timesteps (off the chain).
        gx = jnp.dot(in_seq.astype(w_ih_t.dtype), w_ih_t,
                     preferred_element_type=jnp.float32) + bias    # (T*B_pad, 4H)

        h = jnp.zeros((B_pad, H), jnp.float32)
        c = jnp.zeros((B_pad, H), jnp.float32)
        write_seq = layer < num_layers - 1                # top layer: only h_last is consumed
        outs = []
        # TODO(synk): hold W_hh resident in the MXU across the unrolled steps via
        # pltpu.matmul_push_rhs / matmul_acc_lhs / matmul_pop once bundle dumps
        # confirm Mosaic re-pushes the RHS every step.
        # TODO(synk): if bundles show cross-lane realignment from the 32-lane gate
        # slices below, pre-roll the tanh result by 2H (pltpu.roll) per step.
        for t in range(T):                                # fully unrolled, T=8
            row = t * B_pad
            gates = gx[row:row + B_pad, :] + jnp.dot(
                h.astype(jnp.bfloat16), w_hh_t, preferred_element_type=jnp.float32)
            a = jnp.tanh(gates)        # single EUP pass: tanh(x/2) on i/f/o, tanh(x) on g
            i_g = 0.5 * a[:, 0 * H:1 * H] + 0.5
            f_g = 0.5 * a[:, 1 * H:2 * H] + 0.5
            g_g = a[:, 2 * H:3 * H]
            o_g = 0.5 * a[:, 3 * H:4 * H] + 0.5
            c = f_g * c + i_g * g_g
            h = o_g * jnp.tanh(c)
            if write_seq:
                outs.append(h)
        if write_seq:
            # Inter-layer sequence held in vregs (2 vregs total at this size);
            # no per-step masked stores, no VMEM round-trip.
            in_seq = jnp.concatenate(outs, axis=0)        # (T*B_pad, H)

    # Fused head into one lane-dense (B_pad, OUT_LANES) slab, single unmasked store.
    emb = jnp.dot(h.astype(jnp.bfloat16), wd_ref[...],
                  preferred_element_type=jnp.float32) + ball_ref[...]
    sc = sc_ref[...]                                      # (B_pad, F_PAD): cols Is, fs, qs
    wsc = wsc_ref[...]                                    # (3, OUT_LANES): disjoint lane blocks
    emb = emb + sc[:, 0:1] * wsc[0:1, :]                  # Is branch (VPU broadcast-FMA)
    emb = emb + sc[:, 1:2] * wsc[1:2, :]                  # fs branch
    emb = emb + sc[:, 2:3] * wsc[2:3, :]                  # qs branch
    out_ref[...] = emb


def init_params(key, embed_dim, hidden, layers):
    """Deterministic init mimicking PyTorch's uniform(-1/sqrt(fan), 1/sqrt(fan))."""
    params = {"embed_dim": embed_dim, "hidden": hidden, "layers": layers,
              "w_ih": [], "w_hh": [], "b": []}
    keys = iter(jax.random.split(key, 4 * layers + 8))
    k_lstm = 1.0 / jnp.sqrt(hidden)

    for layer in range(layers):
        in_dim = 3 if layer == 0 else hidden
        w_ih = jax.random.uniform(next(keys), (4 * hidden, in_dim),
                                  minval=-k_lstm, maxval=k_lstm)
        w_hh = jax.random.uniform(next(keys), (4 * hidden, hidden),
                                  minval=-k_lstm, maxval=k_lstm)
        b_ih = jax.random.uniform(next(keys), (4 * hidden,),
                                  minval=-k_lstm, maxval=k_lstm)
        b_hh = jax.random.uniform(next(keys), (4 * hidden,),
                                  minval=-k_lstm, maxval=k_lstm)
        w_ih_t = w_ih.T  # (in_dim, 4H)
        if layer == 0:
            w_ih_t = jnp.pad(w_ih_t, ((0, F_PAD - 3), (0, 0)))  # zero-pad K dim to 8
        params["w_ih"].append(w_ih_t.astype(jnp.float32))
        params["w_hh"].append(w_hh.T.astype(jnp.float32))
        params["b"].append((b_ih + b_hh).reshape(1, 4 * hidden).astype(jnp.float32))

    k_fc = 1.0 / jnp.sqrt(hidden)
    params["wd"] = jax.random.uniform(next(keys), (hidden, embed_dim),
                                      minval=-k_fc, maxval=k_fc).astype(jnp.float32)
    params["bd"] = jax.random.uniform(next(keys), (1, embed_dim),
                                      minval=-k_fc, maxval=k_fc).astype(jnp.float32)
    for name in ("i", "f", "q"):  # fc_Is, fc_fs, fc_qs all have fan_in = 1
        params["w" + name] = jax.random.uniform(next(keys), (1, embed_dim),
                                                minval=-1.0, maxval=1.0).astype(jnp.float32)
        params["b" + name] = jax.random.uniform(next(keys), (1, embed_dim),
                                                minval=-1.0, maxval=1.0).astype(jnp.float32)
    return params


def embedding_forward(params, disp, Is, fs, qs):
    B, T, _ = disp.shape
    E = params["embed_dim"]
    H = params["hidden"]
    L = params["layers"]
    B_pad = _round_up(max(B, B_TILE), B_TILE)
    OUT_LANES = max(128, _round_up(4 * E, 128))   # lane-dense output slab

    # Time-major, batch padded to 8 sublanes, feature padded 3 -> 8, flattened to
    # a (T*B_pad, F_PAD) slab so no in-kernel reshapes are needed.
    x = jnp.transpose(disp, (1, 0, 2)).astype(jnp.float32)             # (T, B, 3)
    x = jnp.pad(x, ((0, 0), (0, B_pad - B), (0, F_PAD - 3)))           # (T, B_pad, 8)
    x = x.reshape(T * B_pad, F_PAD)

    sc = jnp.stack([Is, fs, qs], axis=-1).astype(jnp.float32)          # (B, 3)
    sc = jnp.pad(sc, ((0, B_pad - B), (0, F_PAD - 3)))                 # (B_pad, 8)

    # Gate pre-scale folded into the weights: 0.5 on the i/f/o quarters (sigmoid
    # via 0.5*tanh(x/2)+0.5), 1.0 on g (plain tanh) -> one tanh per step.
    gate_scale = jnp.concatenate([jnp.full((H,), 0.5, jnp.float32),
                                  jnp.full((H,), 0.5, jnp.float32),
                                  jnp.full((H,), 1.0, jnp.float32),
                                  jnp.full((H,), 0.5, jnp.float32)])

    inputs = [x, sc]
    for layer in range(L):
        w_ih = params["w_ih"][layer] * gate_scale                      # (K_in, 4H)
        w_hh = params["w_hh"][layer] * gate_scale                      # (H, 4H)
        b = params["b"][layer] * gate_scale                            # (1, 4H)
        # bf16 MXU operands on/near the serial chain; layer-0 projection stays f32.
        w_ih = w_ih.astype(jnp.float32 if layer == 0 else jnp.bfloat16)
        w_hh = w_hh.astype(jnp.bfloat16)
        inputs += [w_ih, w_hh, b]

    # Head weights: fc_disp into lane block [0, E) of a 128-lane slab (same single
    # MXU pass as (H, E)); fc_Is/fc_fs/fc_qs as per-row lane slabs consumed by VPU
    # broadcast-FMAs in the kernel (no second matmul).
    wd = jnp.zeros((H, OUT_LANES), jnp.float32).at[:, :E].set(params["wd"])
    wd = wd.astype(jnp.bfloat16)
    wsc = jnp.zeros((3, OUT_LANES), jnp.float32)
    wsc = wsc.at[0, 1 * E:2 * E].set(params["wi"][0])                  # Is
    wsc = wsc.at[1, 2 * E:3 * E].set(params["wf"][0])                  # fs
    wsc = wsc.at[2, 3 * E:4 * E].set(params["wq"][0])                  # qs
    ball = jnp.zeros((1, OUT_LANES), jnp.float32)
    ball = ball.at[:, :4 * E].set(jnp.concatenate(
        [params["bd"], params["bi"], params["bf"], params["bq"]], axis=-1))
    inputs += [wd, wsc, ball]

    kernel = functools.partial(embedding_kernel, L, H, T, B_pad)
    out = pl.pallas_call(
        kernel,
        out_shape=jax.ShapeDtypeStruct((B_pad, OUT_LANES), jnp.float32),
        in_specs=[pl.BlockSpec(memory_space=pltpu.MemorySpace.VMEM)] * len(inputs),
        out_specs=pl.BlockSpec(memory_space=pltpu.MemorySpace.VMEM),
    )(*inputs)
    # TODO(synk): add a batch-tile grid with dimension_semantics=("parallel",) once
    # B_pad spans multiple tiles (v7x dual-TC), and chunk the hoisted gates_x over
    # T if T*B_pad*4H*4B approaches the v7x 64 MiB VMEM budget.
    # Strip padding; branch-major flatten == torch.cat([disp, Is, fs, qs]).
    return out[:B, :4 * E].reshape(B, 4, E).transpose(1, 0, 2).reshape(-1)


def reference_forward(params, disp, Is, fs, qs):
    """Pure-JAX f32 reference of the PyTorch forward for validation."""
    B, T, _ = disp.shape
    H = params["hidden"]
    seq = disp.astype(jnp.float32)
    h = None
    for layer in range(params["layers"]):
        w_ih_t = params["w_ih"][layer]
        if layer == 0:
            w_ih_t = w_ih_t[:3]  # strip zero padding
        w_hh_t = params["w_hh"][layer]
        b = params["b"][layer][0]
        h = jnp.zeros((B, H), jnp.float32)
        c = jnp.zeros((B, H), jnp.float32)
        outs = []
        for t in range(T):
            gates = seq[:, t, :] @ w_ih_t + h @ w_hh_t + b
            i = jax.nn.sigmoid(gates[:, :H])
            f = jax.nn.sigmoid(gates[:, H:2 * H])
            g = jnp.tanh(gates[:, 2 * H:3 * H])
            o = jax.nn.sigmoid(gates[:, 3 * H:])
            c = f * c + i * g
            h = o * jnp.tanh(c)
            outs.append(h)
        seq = jnp.stack(outs, axis=1)
    disp_emb = h @ params["wd"] + params["bd"][0]
    is_emb = Is[:, None] * params["wi"][0] + params["bi"][0]
    fs_emb = fs[:, None] * params["wf"][0] + params["bf"][0]
    qs_emb = qs[:, None] * params["wq"][0] + params["bq"][0]
    return jnp.concatenate([disp_emb.reshape(-1), is_emb.reshape(-1),
                            fs_emb.reshape(-1), qs_emb.reshape(-1)])


if __name__ == "__main__":
    EMBED_DIM = 16
    HIDDEN = 32
    LAYERS = 2
    B, T = 2, 8

    key = jax.random.PRNGKey(0)
    k_param, k_disp, k_is, k_fs, k_qs = jax.random.split(key, 5)

    params = init_params(k_param, EMBED_DIM, HIDDEN, LAYERS)
    disp = jax.random.normal(k_disp, (B, T, 3), dtype=jnp.float32)
    Is = jax.random.normal(k_is, (B,), dtype=jnp.float32)
    fs = jax.random.normal(k_fs, (B,), dtype=jnp.float32)
    qs = jax.random.normal(k_qs, (B,), dtype=jnp.float32)

    out = embedding_forward(params, disp, Is, fs, qs)
    out = jax.block_until_ready(out)

    ref = reference_forward(params, disp, Is, fs, qs)
    assert out.shape == (4 * B * EMBED_DIM,), out.shape
    # Tolerance relaxed to 1e-2 for the bf16 MXU operands on the recurrence
    # (review recommendation); f32 cell/hidden state keeps drift well inside it.
    assert jnp.allclose(out, ref, rtol=1e-2, atol=1e-2), float(jnp.max(jnp.abs(out - ref)))

    print("KERNEL_OK")
</pallas_src>

<mosaic_0001>
module attributes {stable_mosaic.version = 11 : i64} {
  func.func @embedding_kernel(%arg0: memref<64x8xf32, #tpu.memory_space<vmem>>, %arg1: memref<8x8xf32, #tpu.memory_space<vmem>>, %arg2: memref<8x128xf32, #tpu.memory_space<vmem>>, %arg3: memref<32x128xbf16, #tpu.memory_space<vmem>>, %arg4: memref<1x128xf32, #tpu.memory_space<vmem>>, %arg5: memref<32x128xbf16, #tpu.memory_space<vmem>>, %arg6: memref<32x128xbf16, #tpu.memory_space<vmem>>, %arg7: memref<1x128xf32, #tpu.memory_space<vmem>>, %arg8: memref<32x128xbf16, #tpu.memory_space<vmem>>, %arg9: memref<3x128xf32, #tpu.memory_space<vmem>>, %arg10: memref<1x128xf32, #tpu.memory_space<vmem>>, %arg11: memref<8x128xf32, #tpu.memory_space<vmem>>) attributes {dimension_semantics = [], scalar_prefetch = 0 : i64, scratch_operands = 0 : i64, tpu.core_type = #tpu.core_type<tc>} {
    %c0 = arith.constant 0 : index
    %c0_0 = arith.constant 0 : index
    %0 = vector.load %arg0[%c0, %c0_0] : memref<64x8xf32, #tpu.memory_space<vmem>>, vector<64x8xf32>
    %c0_1 = arith.constant 0 : index
    %c0_2 = arith.constant 0 : index
    %1 = vector.load %arg2[%c0_1, %c0_2] : memref<8x128xf32, #tpu.memory_space<vmem>>, vector<8x128xf32>
    %c0_3 = arith.constant 0 : index
    %c0_4 = arith.constant 0 : index
    %2 = vector.load %arg3[%c0_3, %c0_4] : memref<32x128xbf16, #tpu.memory_space<vmem>>, vector<32x128xbf16>
    %c0_5 = arith.constant 0 : index
    %c0_6 = arith.constant 0 : index
    %3 = vector.load %arg4[%c0_5, %c0_6] : memref<1x128xf32, #tpu.memory_space<vmem>>, vector<1x128xf32>
    %cst = arith.constant dense<0.000000e+00> : vector<64x128xf32>
    %4 = tpu.matmul %0, %1, %cst {dimension_numbers = #tpu.dot_dimension_numbers<[1], [0], [0], [1], [0, 0, 1, 1], [], []>} : vector<64x8xf32>, vector<8x128xf32>, vector<64x128xf32> -> vector<64x128xf32>
    %5 = vector.broadcast %3 : vector<1x128xf32> to vector<64x128xf32>
    %6 = arith.addf %4, %5 : vector<64x128xf32>
    %cst_7 = arith.constant 0.000000e+00 : f32
    %7 = vector.broadcast %cst_7 : f32 to vector<8x32xf32>
    %cst_8 = arith.constant 0.000000e+00 : f32
    %8 = vector.broadcast %cst_8 : f32 to vector<8x32xf32>
    %9 = vector.extract_strided_slice %6 {offsets = [0, 0], sizes = [8, 128], strides = [1, 1]} : vector<64x128xf32> to vector<8x128xf32>
    %10 = arith.truncf %7 : vector<8x32xf32> to vector<8x32xbf16>
    %cst_9 = arith.constant dense<0.000000e+00> : vector<8x128xf32>
    %11 = tpu.matmul %10, %2, %cst_9 {dimension_numbers = #tpu.dot_dimension_numbers<[1], [0], [0], [1], [0, 0, 1, 1], [], []>} : vector<8x32xbf16>, vector<32x128xbf16>, vector<8x128xf32> -> vector<8x128xf32>
    %12 = arith.addf %9, %11 : vector<8x128xf32>
    %13 = math.tanh %12 : vector<8x128xf32>
    %14 = vector.extract_strided_slice %13 {offsets = [0, 0], sizes = [8, 32], strides = [1, 1]} : vector<8x128xf32> to vector<8x32xf32>
    %cst_10 = arith.constant 5.000000e-01 : f32
    %15 = vector.broadcast %cst_10 : f32 to vector<8x32xf32>
    %16 = arith.mulf %15, %14 : vector<8x32xf32>
    %cst_11 = arith.constant 5.000000e-01 : f32
    %17 = vector.broadcast %cst_11 : f32 to vector<8x32xf32>
    %18 = arith.addf %16, %17 : vector<8x32xf32>
    %19 = vector.extract_strided_slice %13 {offsets = [0, 32], sizes = [8, 32], strides = [1, 1]} : vector<8x128xf32> to vector<8x32xf32>
    %cst_12 = arith.constant 5.000000e-01 : f32
    %20 = vector.broadcast %cst_12 : f32 to vector<8x32xf32>
    %21 = arith.mulf %20, %19 : vector<8x32xf32>
    %cst_13 = arith.constant 5.000000e-01 : f32
    %22 = vector.broadcast %cst_13 : f32 to vector<8x32xf32>
    %23 = arith.addf %21, %22 : vector<8x32xf32>
    %24 = vector.extract_strided_slice %13 {offsets = [0, 64], sizes = [8, 32], strides = [1, 1]} : vector<8x128xf32> to vector<8x32xf32>
    %25 = vector.extract_strided_slice %13 {offsets = [0, 96], sizes = [8, 32], strides = [1, 1]} : vector<8x128xf32> to vector<8x32xf32>
    %cst_14 = arith.constant 5.000000e-01 : f32
    %26 = vector.broadcast %cst_14 : f32 to vector<8x32xf32>
    %27 = arith.mulf %26, %25 : vector<8x32xf32>
    %cst_15 = arith.constant 5.000000e-01 : f32
    %28 = vector.broadcast %cst_15 : f32 to vector<8x32xf32>
    %29 = arith.addf %27, %28 : vector<8x32xf32>
    %30 = arith.mulf %23, %8 : vector<8x32xf32>
    %31 = arith.mulf %18, %24 : vector<8x32xf32>
    %32 = arith.addf %30, %31 : vector<8x32xf32>
    %33 = math.tanh %32 : vector<8x32xf32>
    %34 = arith.mulf %29, %33 : vector<8x32xf32>
    %35 = vector.extract_strided_slice %6 {offsets = [8, 0], sizes = [8, 128], strides = [1, 1]} : vector<64x128xf32> to vector<8x128xf32>
    %36 = arith.truncf %34 : vector<8x32xf32> to vector<8x32xbf16>
    %cst_16 = arith.constant dense<0.000000e+00> : vector<8x128xf32>
    %37 = tpu.matmul %36, %2, %cst_16 {dimension_numbers = #tpu.dot_dimension_numbers<[1], [0], [0], [1], [0, 0, 1, 1], [], []>} : vector<8x32xbf16>, vector<32x128xbf16>, vector<8x128xf32> -> vector<8x128xf32>
    %38 = arith.addf %35, %37 : vector<8x128xf32>
    %39 = math.tanh %38 : vector<8x128xf32>
    %40 = vector.extract_strided_slice %39 {offsets = [0, 0], sizes = [8, 32], strides = [1, 1]} : vector<8x128xf32> to vector<8x32xf32>
    %cst_17 = arith.constant 5.000000e-01 : f32
    %41 = vector.broadcast %cst_17 : f32 to vector<8x32xf32>
    %42 = arith.mulf %41, %40 : vector<8x32xf32>
    %cst_18 = arith.constant 5.000000e-01 : f32
    %43 = vector.broadcast %cst_18 : f32 to vector<8x32xf32>
    %44 = arith.addf %42, %43 : vector<8x32xf32>
    %45 = vector.extract_strided_slice %39 {offsets = [0, 32], sizes = [8, 32], strides = [1, 1]} : vector<8x128xf32> to vector<8x32xf32>
    %cst_19 = arith.constant 5.000000e-01 : f32
    %46 = vector.broadcast %cst_19 : f32 to vector<8x32xf32>
    %47 = arith.mulf %46, %45 : vector<8x32xf32>
    %cst_20 = arith.constant 5.000000e-01 : f32
    %48 = vector.broadcast %cst_20 : f32 to vector<8x32xf32>
    %49 = arith.addf %47, %48 : vector<8x32xf32>
    %50 = vector.extract_strided_slice %39 {offsets = [0, 64], sizes = [8, 32], strides = [1, 1]} : vector<8x128xf32> to vector<8x32xf32>
    %51 = vector.extract_strided_slice %39 {offsets = [0, 96], sizes = [8, 32], strides = [1, 1]} : vector<8x128xf32> to vector<8x32xf32>
    %cst_21 = arith.constant 5.000000e-01 : f32
    %52 = vector.broadcast %cst_21 : f32 to vector<8x32xf32>
    %53 = arith.mulf %52, %51 : vector<8x32xf32>
    %cst_22 = arith.constant 5.000000e-01 : f32
    %54 = vector.broadcast %cst_22 : f32 to vector<8x32xf32>
    %55 = arith.addf %53, %54 : vector<8x32xf32>
    %56 = arith.mulf %49, %32 : vector<8x32xf32>
    %57 = arith.mulf %44, %50 : vector<8x32xf32>
    %58 = arith.addf %56, %57 : vector<8x32xf32>
    %59 = math.tanh %58 : vector<8x32xf32>
    %60 = arith.mulf %55, %59 : vector<8x32xf32>
    %61 = vector.extract_strided_slice %6 {offsets = [16, 0], sizes = [8, 128], strides = [1, 1]} : vector<64x128xf32> to vector<8x128xf32>
    %62 = arith.truncf %60 : vector<8x32xf32> to vector<8x32xbf16>
    %cst_23 = arith.constant dense<0.000000e+00> : vector<8x128xf32>
    %63 = tpu.matmul %62, %2, %cst_23 {dimension_numbers = #tpu.dot_dimension_numbers<[1], [0], [0], [1], [0, 0, 1, 1], [], []>} : vector<8x32xbf16>, vector<32x128xbf16>, vector<8x128xf32> -> vector<8x128xf32>
    %64 = arith.addf %61, %63 : vector<8x128xf32>
    %65 = math.tanh %64 : vector<8x128xf32>
    %66 = vector.extract_strided_slice %65 {offsets = [0, 0], sizes = [8, 32], strides = [1, 1]} : vector<8x128xf32> to vector<8x32xf32>
    %cst_24 = arith.constant 5.000000e-01 : f32
    %67 = vector.broadcast %cst_24 : f32 to vector<8x32xf32>
    %68 = arith.mulf %67, %66 : vector<8x32xf32>
    %cst_25 = arith.constant 5.000000e-01 : f32
    %69 = vector.broadcast %cst_25 : f32 to vector<8x32xf32>
    %70 = arith.addf %68, %69 : vector<8x32xf32>
    %71 = vector.extract_strided_slice %65 {offsets = [0, 32], sizes = [8, 32], strides = [1, 1]} : vector<8x128xf32> to vector<8x32xf32>
    %cst_26 = arith.constant 5.000000e-01 : f32
    %72 = vector.broadcast %cst_26 : f32 to vector<8x32xf32>
    %73 = arith.mulf %72, %71 : vector<8x32xf32>
    %cst_27 = arith.constant 5.000000e-01 : f32
    %74 = vector.broadcast %cst_27 : f32 to vector<8x32xf32>
    %75 = arith.addf %73, %74 : vector<8x32xf32>
    %76 = vector.extract_strided_slice %65 {offsets = [0, 64], sizes = [8, 32], strides = [1, 1]} : vector<8x128xf32> to vector<8x32xf32>
    %77 = vector.extract_strided_slice %65 {offsets = [0, 96], sizes = [8, 32], strides = [1, 1]} : vector<8x128xf32> to vector<8x32xf32>
    %cst_28 = arith.constant 5.000000e-01 : f32
    %78 = vector.broadcast %cst_28 : f32 to vector<8x32xf32>
    %79 = arith.mulf %78, %77 : vector<8x32xf32>
    %cst_29 = arith.constant 5.000000e-01 : f32
    %80 = vector.broadcast %cst_29 : f32 to vector<8x32xf32>
    %81 = arith.addf %79, %80 : vector<8x32xf32>
    %82 = arith.mulf %75, %58 : vector<8x32xf32>
    %83 = arith.mulf %70, %76 : vector<8x32xf32>
    %84 = arith.addf %82, %83 : vector<8x32xf32>
    %85 = math.tanh %84 : vector<8x32xf32>
    %86 = arith.mulf %81, %85 : vector<8x32xf32>
    %87 = vector.extract_strided_slice %6 {offsets = [24, 0], sizes = [8, 128], strides = [1, 1]} : vector<64x128xf32> to vector<8x128xf32>
    %88 = arith.truncf %86 : vector<8x32xf32> to vector<8x32xbf16>
    %cst_30 = arith.constant dense<0.000000e+00> : vector<8x128xf32>
    %89 = tpu.matmul %88, %2, %cst_30 {dimension_numbers = #tpu.dot_dimension_numbers<[1], [0], [0], [1], [0, 0, 1, 1], [], []>} : vector<8x32xbf16>, vector<32x128xbf16>, vector<8x128xf32> -> vector<8x128xf32>
    %90 = arith.addf %87, %89 : vector<8x128xf32>
    %91 = math.tanh %90 : vector<8x128xf32>
    %92 = vector.extract_strided_slice %91 {offsets = [0, 0], sizes = [8, 32], strides = [1, 1]} : vector<8x128xf32> to vector<8x32xf32>
    %cst_31 = arith.constant 5.000000e-01 : f32
    %93 = vector.broadcast %cst_31 : f32 to vector<8x32xf32>
    %94 = arith.mulf %93, %92 : vector<8x32xf32>
    %cst_32 = arith.constant 5.000000e-01 : f32
    %95 = vector.broadcast %cst_32 : f32 to vector<8x32xf32>
    %96 = arith.addf %94, %95 : vector<8x32xf32>
    %97 = vector.extract_strided_slice %91 {offsets = [0, 32], sizes = [8, 32], strides = [1, 1]} : vector<8x128xf32> to vector<8x32xf32>
    %cst_33 = arith.constant 5.000000e-01 : f32
    %98 = vector.broadcast %cst_33 : f32 to vector<8x32xf32>
    %99 = arith.mulf %98, %97 : vector<8x32xf32>
    %cst_34 = arith.constant 5.000000e-01 : f32
    %100 = vector.broadcast %cst_34 : f32 to vector<8x32xf32>
    %101 = arith.addf %99, %100 : vector<8x32xf32>
    %102 = vector.extract_strided_slice %91 {offsets = [0, 64], sizes = [8, 32], strides = [1, 1]} : vector<8x128xf32> to vector<8x32xf32>
    %103 = vector.extract_strided_slice %91 {offsets = [0, 96], sizes = [8, 32], strides = [1, 1]} : vector<8x128xf32> to vector<8x32xf32>
    %cst_35 = arith.constant 5.000000e-01 : f32
    %104 = vector.broadcast %cst_35 : f32 to vector<8x32xf32>
    %105 = arith.mulf %104, %103 : vector<8x32xf32>
    %cst_36 = arith.constant 5.000000e-01 : f32
    %106 = vector.broadcast %cst_36 : f32 to vector<8x32xf32>
    %107 = arith.addf %105, %106 : vector<8x32xf32>
    %108 = arith.mulf %101, %84 : vector<8x32xf32>
    %109 = arith.mulf %96, %102 : vector<8x32xf32>
    %110 = arith.addf %108, %109 : vector<8x32xf32>
    %111 = math.tanh %110 : vector<8x32xf32>
    %112 = arith.mulf %107, %111 : vector<8x32xf32>
    %113 = vector.extract_strided_slice %6 {offsets = [32, 0], sizes = [8, 128], strides = [1, 1]} : vector<64x128xf32> to vector<8x128xf32>
    %114 = arith.truncf %112 : vector<8x32xf32> to vector<8x32xbf16>
    %cst_37 = arith.constant dense<0.000000e+00> : vector<8x128xf32>
    %115 = tpu.matmul %114, %2, %cst_37 {dimension_numbers = #tpu.dot_dimension_numbers<[1], [0], [0], [1], [0, 0, 1, 1], [], []>} : vector<8x32xbf16>, vector<32x128xbf16>, vector<8x128xf32> -> vector<8x128xf32>
    %116 = arith.addf %113, %115 : vector<8x128xf32>
    %117 = math.tanh %116 : vector<8x128xf32>
    %118 = vector.extract_strided_slice %117 {offsets = [0, 0], sizes = [8, 32], strides = [1, 1]} : vector<8x128xf32> to vector<8x32xf32>
    %cst_38 = arith.constant 5.000000e-01 : f32
    %119 = vector.broadcast %cst_38 : f32 to vector<8x32xf32>
    %120 = arith.mulf %119, %118 : vector<8x32xf32>
    %cst_39 = arith.constant 5.000000e-01 : f32
    %121 = vector.broadcast %cst_39 : f32 to vector<8x32xf32>
    %122 = arith.addf %120, %121 : vector<8x32xf32>
    %123 = vector.extract_strided_slice %117 {offsets = [0, 32], sizes = [8, 32], strides = [1, 1]} : vector<8x128xf32> to vector<8x32xf32>
    %cst_40 = arith.constant 5.000000e-01 : f32
    %124 = vector.broadcast %cst_40 : f32 to vector<8x32xf32>
    %125 = arith.mulf %124, %123 : vector<8x32xf32>
    %cst_41 = arith.constant 5.000000e-01 : f32
    %126 = vector.broadcast %cst_41 : f32 to vector<8x32xf32>
    %127 = arith.addf %125, %126 : vector<8x32xf32>
    %128 = vector.extract_strided_slice %117 {offsets = [0, 64], sizes = [8, 32], strides = [1, 1]} : vector<8x128xf32> to vector<8x32xf32>
    %129 = vector.extract_strided_slice %117 {offsets = [0, 96], sizes = [8, 32], strides = [1, 1]} : vector<8x128xf32> to vector<8x32xf32>
    %cst_42 = arith.constant 5.000000e-01 : f32
    %130 = vector.broadcast %cst_42 : f32 to vector<8x32xf32>
    %131 = arith.mulf %130, %129 : vector<8x32xf32>
    %cst_43 = arith.constant 5.000000e-01 : f32
    %132 = vector.broadcast %cst_43 : f32 to vector<8x32xf32>
    %133 = arith.addf %131, %132 : vector<8x32xf32>
    %134 = arith.mulf %127, %110 : vector<8x32xf32>
    %135 = arith.mulf %122, %128 : vector<8x32xf32>
    %136 = arith.addf %134, %135 : vector<8x32xf32>
    %137 = math.tanh %136 : vector<8x32xf32>
    %138 = arith.mulf %133, %137 : vector<8x32xf32>
    %139 = vector.extract_strided_slice %6 {offsets = [40, 0], sizes = [8, 128], strides = [1, 1]} : vector<64x128xf32> to vector<8x128xf32>
    %140 = arith.truncf %138 : vector<8x32xf32> to vector<8x32xbf16>
    %cst_44 = arith.constant dense<0.000000e+00> : vector<8x128xf32>
    %141 = tpu.matmul %140, %2, %cst_44 {dimension_numbers = #tpu.dot_dimension_numbers<[1], [0], [0], [1], [0, 0, 1, 1], [], []>} : vector<8x32xbf16>, vector<32x128xbf16>, vector<8x128xf32> -> vector<8x128xf32>
    %142 = arith.addf %139, %141 : vector<8x128xf32>
    %143 = math.tanh %142 : vector<8x128xf32>
    %144 = vector.extract_strided_slice %143 {offsets = [0, 0], sizes = [8, 32], strides = [1, 1]} : vector<8x128xf32> to vector<8x32xf32>
    %cst_45 = arith.constant 5.000000e-01 : f32
    %145 = vector.broadcast %cst_45 : f32 to vector<8x32xf32>
    %146 = arith.mulf %145, %144 : vector<8x32xf32>
    %cst_46 = arith.constant 5.000000e-01 : f32
    %147 = vector.broadcast %cst_46 : f32 to vector<8x32xf32>
    %148 = arith.addf %146, %147 : vector<8x32xf32>
    %149 = vector.extract_strided_slice %143 {offsets = [0, 32], sizes = [8, 32], strides = [1, 1]} : vector<8x128xf32> to vector<8x32xf32>
    %cst_47 = arith.constant 5.000000e-01 : f32
    %150 = vector.broadcast %cst_47 : f32 to vector<8x32xf32>
    %151 = arith.mulf %150, %149 : vector<8x32xf32>
    %cst_48 = arith.constant 5.000000e-01 : f32
    %152 = vector.broadcast %cst_48 : f32 to vector<8x32xf32>
    %153 = arith.addf %151, %152 : vector<8x32xf32>
    %154 = vector.extract_strided_slice %143 {offsets = [0, 64], sizes = [8, 32], strides = [1, 1]} : vector<8x128xf32> to vector<8x32xf32>
    %155 = vector.extract_strided_slice %143 {offsets = [0, 96], sizes = [8, 32], strides = [1, 1]} : vector<8x128xf32> to vector<8x32xf32>
    %cst_49 = arith.constant 5.000000e-01 : f32
    %156 = vector.broadcast %cst_49 : f32 to vector<8x32xf32>
    %157 = arith.mulf %156, %155 : vector<8x32xf32>
    %cst_50 = arith.constant 5.000000e-01 : f32
    %158 = vector.broadcast %cst_50 : f32 to vector<8x32xf32>
    %159 = arith.addf %157, %158 : vector<8x32xf32>
    %160 = arith.mulf %153, %136 : vector<8x32xf32>
    %161 = arith.mulf %148, %154 : vector<8x32xf32>
    %162 = arith.addf %160, %161 : vector<8x32xf32>
    %163 = math.tanh %162 : vector<8x32xf32>
    %164 = arith.mulf %159, %163 : vector<8x32xf32>
    %165 = vector.extract_strided_slice %6 {offsets = [48, 0], sizes = [8, 128], strides = [1, 1]} : vector<64x128xf32> to vector<8x128xf32>
    %166 = arith.truncf %164 : vector<8x32xf32> to vector<8x32xbf16>
    %cst_51 = arith.constant dense<0.000000e+00> : vector<8x128xf32>
    %167 = tpu.matmul %166, %2, %cst_51 {dimension_numbers = #tpu.dot_dimension_numbers<[1], [0], [0], [1], [0, 0, 1, 1], [], []>} : vector<8x32xbf16>, vector<32x128xbf16>, vector<8x128xf32> -> vector<8x128xf32>
    %168 = arith.addf %165, %167 : vector<8x128xf32>
    %169 = math.tanh %168 : vector<8x128xf32>
    %170 = vector.extract_strided_slice %169 {offsets = [0, 0], sizes = [8, 32], strides = [1, 1]} : vector<8x128xf32> to vector<8x32xf32>
    %cst_52 = arith.constant 5.000000e-01 : f32
    %171 = vector.broadcast %cst_52 : f32 to vector<8x32xf32>
    %172 = arith.mulf %171, %170 : vector<8x32xf32>
    %cst_53 = arith.constant 5.000000e-01 : f32
    %173 = vector.broadcast %cst_53 : f32 to vector<8x32xf32>
    %174 = arith.addf %172, %173 : vector<8x32xf32>
    %175 = vector.extract_strided_slice %169 {offsets = [0, 32], sizes = [8, 32], strides = [1, 1]} : vector<8x128xf32> to vector<8x32xf32>
    %cst_54 = arith.constant 5.000000e-01 : f32
    %176 = vector.broadcast %cst_54 : f32 to vector<8x32xf32>
    %177 = arith.mulf %176, %175 : vector<8x32xf32>
    %cst_55 = arith.constant 5.000000e-01 : f32
    %178 = vector.broadcast %cst_55 : f32 to vector<8x32xf32>
    %179 = arith.addf %177, %178 : vector<8x32xf32>
    %180 = vector.extract_strided_slice %169 {offsets = [0, 64], sizes = [8, 32], strides = [1, 1]} : vector<8x128xf32> to vector<8x32xf32>
    %181 = vector.extract_strided_slice %169 {offsets = [0, 96], sizes = [8, 32], strides = [1, 1]} : vector<8x128xf32> to vector<8x32xf32>
    %cst_56 = arith.constant 5.000000e-01 : f32
    %182 = vector.broadcast %cst_56 : f32 to vector<8x32xf32>
    %183 = arith.mulf %182, %181 : vector<8x32xf32>
    %cst_57 = arith.constant 5.000000e-01 : f32
    %184 = vector.broadcast %cst_57 : f32 to vector<8x32xf32>
    %185 = arith.addf %183, %184 : vector<8x32xf32>
    %186 = arith.mulf %179, %162 : vector<8x32xf32>
    %187 = arith.mulf %174, %180 : vector<8x32xf32>
    %188 = arith.addf %186, %187 : vector<8x32xf32>
    %189 = math.tanh %188 : vector<8x32xf32>
    %190 = arith.mulf %185, %189 : vector<8x32xf32>
    %191 = vector.extract_strided_slice %6 {offsets = [56, 0], sizes = [8, 128], strides = [1, 1]} : vector<64x128xf32> to vector<8x128xf32>
    %192 = arith.truncf %190 : vector<8x32xf32> to vector<8x32xbf16>
    %cst_58 = arith.constant dense<0.000000e+00> : vector<8x128xf32>
    %193 = tpu.matmul %192, %2, %cst_58 {dimension_numbers = #tpu.dot_dimension_numbers<[1], [0], [0], [1], [0, 0, 1, 1], [], []>} : vector<8x32xbf16>, vector<32x128xbf16>, vector<8x128xf32> -> vector<8x128xf32>
    %194 = arith.addf %191, %193 : vector<8x128xf32>
    %195 = math.tanh %194 : vector<8x128xf32>
    %196 = vector.extract_strided_slice %195 {offsets = [0, 0], sizes = [8, 32], strides = [1, 1]} : vector<8x128xf32> to vector<8x32xf32>
    %cst_59 = arith.constant 5.000000e-01 : f32
    %197 = vector.broadcast %cst_59 : f32 to vector<8x32xf32>
    %198 = arith.mulf %197, %196 : vector<8x32xf32>
    %cst_60 = arith.constant 5.000000e-01 : f32
    %199 = vector.broadcast %cst_60 : f32 to vector<8x32xf32>
    %200 = arith.addf %198, %199 : vector<8x32xf32>
    %201 = vector.extract_strided_slice %195 {offsets = [0, 32], sizes = [8, 32], strides = [1, 1]} : vector<8x128xf32> to vector<8x32xf32>
    %cst_61 = arith.constant 5.000000e-01 : f32
    %202 = vector.broadcast %cst_61 : f32 to vector<8x32xf32>
    %203 = arith.mulf %202, %201 : vector<8x32xf32>
    %cst_62 = arith.constant 5.000000e-01 : f32
    %204 = vector.broadcast %cst_62 : f32 to vector<8x32xf32>
    %205 = arith.addf %203, %204 : vector<8x32xf32>
    %206 = vector.extract_strided_slice %195 {offsets = [0, 64], sizes = [8, 32], strides = [1, 1]} : vector<8x128xf32> to vector<8x32xf32>
    %207 = vector.extract_strided_slice %195 {offsets = [0, 96], sizes = [8, 32], strides = [1, 1]} : vector<8x128xf32> to vector<8x32xf32>
    %cst_63 = arith.constant 5.000000e-01 : f32
    %208 = vector.broadcast %cst_63 : f32 to vector<8x32xf32>
    %209 = arith.mulf %208, %207 : vector<8x32xf32>
    %cst_64 = arith.constant 5.000000e-01 : f32
    %210 = vector.broadcast %cst_64 : f32 to vector<8x32xf32>
    %211 = arith.addf %209, %210 : vector<8x32xf32>
    %212 = arith.mulf %205, %188 : vector<8x32xf32>
    %213 = arith.mulf %200, %206 : vector<8x32xf32>
    %214 = arith.addf %212, %213 : vector<8x32xf32>
    %215 = math.tanh %214 : vector<8x32xf32>
    %216 = arith.mulf %211, %215 : vector<8x32xf32>
    %217 = tpu.concatenate %34, %60, %86, %112, %138, %164, %190, %216 in 0 : vector<8x32xf32>, vector<8x32xf32>, vector<8x32xf32>, vector<8x32xf32>, vector<8x32xf32>, vector<8x32xf32>, vector<8x32xf32>, vector<8x32xf32> -> vector<64x32xf32>
    %c0_65 = arith.constant 0 : index
    %c0_66 = arith.constant 0 : index
    %218 = vector.load %arg5[%c0_65, %c0_66] : memref<32x128xbf16, #tpu.memory_space<vmem>>, vector<32x128xbf16>
    %c0_67 = arith.constant 0 : index
    %c0_68 = arith.constant 0 : index
    %219 = vector.load %arg6[%c0_67, %c0_68] : memref<32x128xbf16, #tpu.memory_space<vmem>>, vector<32x128xbf16>
    %c0_69 = arith.constant 0 : index
    %c0_70 = arith.constant 0 : index
    %220 = vector.load %arg7[%c0_69, %c0_70] : memref<1x128xf32, #tpu.memory_space<vmem>>, vector<1x128xf32>
    %221 = arith.truncf %217 : vector<64x32xf32> to vector<64x32xbf16>
    %cst_71 = arith.constant dense<0.000000e+00> : vector<64x128xf32>
    %222 = tpu.matmul %221, %218, %cst_71 {dimension_numbers = #tpu.dot_dimension_numbers<[1], [0], [0], [1], [0, 0, 1, 1], [], []>} : vector<64x32xbf16>, vector<32x128xbf16>, vector<64x128xf32> -> vector<64x128xf32>
    %223 = vector.broadcast %220 : vector<1x128xf32> to vector<64x128xf32>
    %224 = arith.addf %222, %223 : vector<64x128xf32>
    %cst_72 = arith.constant 0.000000e+00 : f32
    %225 = vector.broadcast %cst_72 : f32 to vector<8x32xf32>
    %cst_73 = arith.constant 0.000000e+00 : f32
    %226 = vector.broadcast %cst_73 : f32 to vector<8x32xf32>
    %227 = vector.extract_strided_slice %224 {offsets = [0, 0], sizes = [8, 128], strides = [1, 1]} : vector<64x128xf32> to vector<8x128xf32>
    %228 = arith.truncf %225 : vector<8x32xf32> to vector<8x32xbf16>
    %cst_74 = arith.constant dense<0.000000e+00> : vector<8x128xf32>
    %229 = tpu.matmul %228, %219, %cst_74 {dimension_numbers = #tpu.dot_dimension_numbers<[1], [0], [0], [1], [0, 0, 1, 1], [], []>} : vector<8x32xbf16>, vector<32x128xbf16>, vector<8x128xf32> -> vector<8x128xf32>
    %230 = arith.addf %227, %229 : vector<8x128xf32>
    %231 = math.tanh %230 : vector<8x128xf32>
    %232 = vector.extract_strided_slice %231 {offsets = [0, 0], sizes = [8, 32], strides = [1, 1]} : vector<8x128xf32> to vector<8x32xf32>
    %cst_75 = arith.constant 5.000000e-01 : f32
    %233 = vector.broadcast %cst_75 : f32 to vector<8x32xf32>
    %234 = arith.mulf %233, %232 : vector<8x32xf32>
    %cst_76 = arith.constant 5.000000e-01 : f32
    %235 = vector.broadcast %cst_76 : f32 to vector<8x32xf32>
    %236 = arith.addf %234, %235 : vector<8x32xf32>
    %237 = vector.extract_strided_slice %231 {offsets = [0, 32], sizes = [8, 32], strides = [1, 1]} : vector<8x128xf32> to vector<8x32xf32>
    %cst_77 = arith.constant 5.000000e-01 : f32
    %238 = vector.broadcast %cst_77 : f32 to vector<8x32xf32>
    %239 = arith.mulf %238, %237 : vector<8x32xf32>
    %cst_78 = arith.constant 5.000000e-01 : f32
    %240 = vector.broadcast %cst_78 : f32 to vector<8x32xf32>
    %241 = arith.addf %239, %240 : vector<8x32xf32>
    %242 = vector.extract_strided_slice %231 {offsets = [0, 64], sizes = [8, 32], strides = [1, 1]} : vector<8x128xf32> to vector<8x32xf32>
    %243 = vector.extract_strided_slice %231 {offsets = [0, 96], sizes = [8, 32], strides = [1, 1]} : vector<8x128xf32> to vector<8x32xf32>
    %cst_79 = arith.constant 5.000000e-01 : f32
    %244 = vector.broadcast %cst_79 : f32 to vector<8x32xf32>
    %245 = arith.mulf %244, %243 : vector<8x32xf32>
    %cst_80 = arith.constant 5.000000e-01 : f32
    %246 = vector.broadcast %cst_80 : f32 to vector<8x32xf32>
    %247 = arith.addf %245, %246 : vector<8x32xf32>
    %248 = arith.mulf %241, %226 : vector<8x32xf32>
    %249 = arith.mulf %236, %242 : vector<8x32xf32>
    %250 = arith.addf %248, %249 : vector<8x32xf32>
    %251 = math.tanh %250 : vector<8x32xf32>
    %252 = arith.mulf %247, %251 : vector<8x32xf32>
    %253 = vector.extract_strided_slice %224 {offsets = [8, 0], sizes = [8, 128], strides = [1, 1]} : vector<64x128xf32> to vector<8x128xf32>
    %254 = arith.truncf %252 : vector<8x32xf32> to vector<8x32xbf16>
    %cst_81 = arith.constant dense<0.000000e+00> : vector<8x128xf32>
    %255 = tpu.matmul %254, %219, %cst_81 {dimension_numbers = #tpu.dot_dimension_numbers<[1], [0], [0], [1], [0, 0, 1, 1], [], []>} : vector<8x32xbf16>, vector<32x128xbf16>, vector<8x128xf32> -> vector<8x128xf32>
    %256 = arith.addf %253, %255 : vector<8x128xf32>
    %257 = math.tanh %256 : vector<8x128xf32>
    %258 = vector.extract_strided_slice %257 {offsets = [0, 0], sizes = [8, 32], strides = [1, 1]} : vector<8x128xf32> to vector<8x32xf32>
    %cst_82 = arith.constant 5.000000e-01 : f32
    %259 = vector.broadcast %cst_82 : f32 to vector<8x32xf32>
    %260 = arith.mulf %259, %258 : vector<8x32xf32>
    %cst_83 = arith.constant 5.000000e-01 : f32
    %261 = vector.broadcast %cst_83 : f32 to vector<8x32xf32>
    %262 = arith.addf %260, %261 : vector<8x32xf32>
    %263 = vector.extract_strided_slice %257 {offsets = [0, 32], sizes = [8, 32], strides = [1, 1]} : vector<8x128xf32> to vector<8x32xf32>
    %cst_84 = arith.constant 5.000000e-01 : f32
    %264 = vector.broadcast %cst_84 : f32 to vector<8x32xf32>
    %265 = arith.mulf %264, %263 : vector<8x32xf32>
    %cst_85 = arith.constant 5.000000e-01 : f32
    %266 = vector.broadcast %cst_85 : f32 to vector<8x32xf32>
    %267 = arith.addf %265, %266 : vector<8x32xf32>
    %268 = vector.extract_strided_slice %257 {offsets = [0, 64], sizes = [8, 32], strides = [1, 1]} : vector<8x128xf32> to vector<8x32xf32>
    %269 = vector.extract_strided_slice %257 {offsets = [0, 96], sizes = [8, 32], strides = [1, 1]} : vector<8x128xf32> to vector<8x32xf32>
    %cst_86 = arith.constant 5.000000e-01 : f32
    %270 = vector.broadcast %cst_86 : f32 to vector<8x32xf32>
    %271 = arith.mulf %270, %269 : vector<8x32xf32>
    %cst_87 = arith.constant 5.000000e-01 : f32
    %272 = vector.broadcast %cst_87 : f32 to vector<8x32xf32>
    %273 = arith.addf %271, %272 : vector<8x32xf32>
    %274 = arith.mulf %267, %250 : vector<8x32xf32>
    %275 = arith.mulf %262, %268 : vector<8x32xf32>
    %276 = arith.addf %274, %275 : vector<8x32xf32>
    %277 = math.tanh %276 : vector<8x32xf32>
    %278 = arith.mulf %273, %277 : vector<8x32xf32>
    %279 = vector.extract_strided_slice %224 {offsets = [16, 0], sizes = [8, 128], strides = [1, 1]} : vector<64x128xf32> to vector<8x128xf32>
    %280 = arith.truncf %278 : vector<8x32xf32> to vector<8x32xbf16>
    %cst_88 = arith.constant dense<0.000000e+00> : vector<8x128xf32>
    %281 = tpu.matmul %280, %219, %cst_88 {dimension_numbers = #tpu.dot_dimension_numbers<[1], [0], [0], [1], [0, 0, 1, 1], [], []>} : vector<8x32xbf16>, vector<32x128xbf16>, vector<8x128xf32> -> vector<8x128xf32>
    %282 = arith.addf %279, %281 : vector<8x128xf32>
    %283 = math.tanh %282 : vector<8x128xf32>
    %284 = vector.extract_strided_slice %283 {offsets = [0, 0], sizes = [8, 32], strides = [1, 1]} : vector<8x128xf32> to vector<8x32xf32>
    %cst_89 = arith.constant 5.000000e-01 : f32
    %285 = vector.broadcast %cst_89 : f32 to vector<8x32xf32>
    %286 = arith.mulf %285, %284 : vector<8x32xf32>
    %cst_90 = arith.constant 5.000000e-01 : f32
    %287 = vector.broadcast %cst_90 : f32 to vector<8x32xf32>
    %288 = arith.addf %286, %287 : vector<8x32xf32>
    %289 = vector.extract_strided_slice %283 {offsets = [0, 32], sizes = [8, 32], strides = [1, 1]} : vector<8x128xf32> to vector<8x32xf32>
    %cst_91 = arith.constant 5.000000e-01 : f32
    %290 = vector.broadcast %cst_91 : f32 to vector<8x32xf32>
    %291 = arith.mulf %290, %289 : vector<8x32xf32>
    %cst_92 = arith.constant 5.000000e-01 : f32
    %292 = vector.broadcast %cst_92 : f32 to vector<8x32xf32>
    %293 = arith.addf %291, %292 : vector<8x32xf32>
    %294 = vector.extract_strided_slice %283 {offsets = [0, 64], sizes = [8, 32], strides = [1, 1]} : vector<8x128xf32> to vector<8x32xf32>
    %295 = vector.extract_strided_slice %283 {offsets = [0, 96], sizes = [8, 32], strides = [1, 1]} : vector<8x128xf32> to vector<8x32xf32>
    %cst_93 = arith.constant 5.000000e-01 : f32
    %296 = vector.broadcast %cst_93 : f32 to vector<8x32xf32>
    %297 = arith.mulf %296, %295 : vector<8x32xf32>
    %cst_94 = arith.constant 5.000000e-01 : f32
    %298 = vector.broadcast %cst_94 : f32 to vector<8x32xf32>
    %299 = arith.addf %297, %298 : vector<8x32xf32>
    %300 = arith.mulf %293, %276 : vector<8x32xf32>
    %301 = arith.mulf %288, %294 : vector<8x32xf32>
    %302 = arith.addf %300, %301 : vector<8x32xf32>
    %303 = math.tanh %302 : vector<8x32xf32>
    %304 = arith.mulf %299, %303 : vector<8x32xf32>
    %305 = vector.extract_strided_slice %224 {offsets = [24, 0], sizes = [8, 128], strides = [1, 1]} : vector<64x128xf32> to vector<8x128xf32>
    %306 = arith.truncf %304 : vector<8x32xf32> to vector<8x32xbf16>
    %cst_95 = arith.constant dense<0.000000e+00> : vector<8x128xf32>
    %307 = tpu.matmul %306, %219, %cst_95 {dimension_numbers = #tpu.dot_dimension_numbers<[1], [0], [0], [1], [0, 0, 1, 1], [], []>} : vector<8x32xbf16>, vector<32x128xbf16>, vector<8x128xf32> -> vector<8x128xf32>
    %308 = arith.addf %305, %307 : vector<8x128xf32>
    %309 = math.tanh %308 : vector<8x128xf32>
    %310 = vector.extract_strided_slice %309 {offsets = [0, 0], sizes = [8, 32], strides = [1, 1]} : vector<8x128xf32> to vector<8x32xf32>
    %cst_96 = arith.constant 5.000000e-01 : f32
    %311 = vector.broadcast %cst_96 : f32 to vector<8x32xf32>
    %312 = arith.mulf %311, %310 : vector<8x32xf32>
    %cst_97 = arith.constant 5.000000e-01 : f32
    %313 = vector.broadcast %cst_97 : f32 to vector<8x32xf32>
    %314 = arith.addf %312, %313 : vector<8x32xf32>
    %315 = vector.extract_strided_slice %309 {offsets = [0, 32], sizes = [8, 32], strides = [1, 1]} : vector<8x128xf32> to vector<8x32xf32>
    %cst_98 = arith.constant 5.000000e-01 : f32
    %316 = vector.broadcast %cst_98 : f32 to vector<8x32xf32>
    %317 = arith.mulf %316, %315 : vector<8x32xf32>
    %cst_99 = arith.constant 5.000000e-01 : f32
    %318 = vector.broadcast %cst_99 : f32 to vector<8x32xf32>
    %319 = arith.addf %317, %318 : vector<8x32xf32>
    %320 = vector.extract_strided_slice %309 {offsets = [0, 64], sizes = [8, 32], strides = [1, 1]} : vector<8x128xf32> to vector<8x32xf32>
    %321 = vector.extract_strided_slice %309 {offsets = [0, 96], sizes = [8, 32], strides = [1, 1]} : vector<8x128xf32> to vector<8x32xf32>
    %cst_100 = arith.constant 5.000000e-01 : f32
    %322 = vector.broadcast %cst_100 : f32 to vector<8x32xf32>
    %323 = arith.mulf %322, %321 : vector<8x32xf32>
    %cst_101 = arith.constant 5.000000e-01 : f32
    %324 = vector.broadcast %cst_101 : f32 to vector<8x32xf32>
    %325 = arith.addf %323, %324 : vector<8x32xf32>
    %326 = arith.mulf %319, %302 : vector<8x32xf32>
    %327 = arith.mulf %314, %320 : vector<8x32xf32>
    %328 = arith.addf %326, %327 : vector<8x32xf32>
    %329 = math.tanh %328 : vector<8x32xf32>
    %330 = arith.mulf %325, %329 : vector<8x32xf32>
    %331 = vector.extract_strided_slice %224 {offsets = [32, 0], sizes = [8, 128], strides = [1, 1]} : vector<64x128xf32> to vector<8x128xf32>
    %332 = arith.truncf %330 : vector<8x32xf32> to vector<8x32xbf16>
    %cst_102 = arith.constant dense<0.000000e+00> : vector<8x128xf32>
    %333 = tpu.matmul %332, %219, %cst_102 {dimension_numbers = #tpu.dot_dimension_numbers<[1], [0], [0], [1], [0, 0, 1, 1], [], []>} : vector<8x32xbf16>, vector<32x128xbf16>, vector<8x128xf32> -> vector<8x128xf32>
    %334 = arith.addf %331, %333 : vector<8x128xf32>
    %335 = math.tanh %334 : vector<8x128xf32>
    %336 = vector.extract_strided_slice %335 {offsets = [0, 0], sizes = [8, 32], strides = [1, 1]} : vector<8x128xf32> to vector<8x32xf32>
    %cst_103 = arith.constant 5.000000e-01 : f32
    %337 = vector.broadcast %cst_103 : f32 to vector<8x32xf32>
    %338 = arith.mulf %337, %336 : vector<8x32xf32>
    %cst_104 = arith.constant 5.000000e-01 : f32
    %339 = vector.broadcast %cst_104 : f32 to vector<8x32xf32>
    %340 = arith.addf %338, %339 : vector<8x32xf32>
    %341 = vector.extract_strided_slice %335 {offsets = [0, 32], sizes = [8, 32], strides = [1, 1]} : vector<8x128xf32> to vector<8x32xf32>
    %cst_105 = arith.constant 5.000000e-01 : f32
    %342 = vector.broadcast %cst_105 : f32 to vector<8x32xf32>
    %343 = arith.mulf %342, %341 : vector<8x32xf32>
    %cst_106 = arith.constant 5.000000e-01 : f32
    %344 = vector.broadcast %cst_106 : f32 to vector<8x32xf32>
    %345 = arith.addf %343, %344 : vector<8x32xf32>
    %346 = vector.extract_strided_slice %335 {offsets = [0, 64], sizes = [8, 32], strides = [1, 1]} : vector<8x128xf32> to vector<8x32xf32>
    %347 = vector.extract_strided_slice %335 {offsets = [0, 96], sizes = [8, 32], strides = [1, 1]} : vector<8x128xf32> to vector<8x32xf32>
    %cst_107 = arith.constant 5.000000e-01 : f32
    %348 = vector.broadcast %cst_107 : f32 to vector<8x32xf32>
    %349 = arith.mulf %348, %347 : vector<8x32xf32>
    %cst_108 = arith.constant 5.000000e-01 : f32
    %350 = vector.broadcast %cst_108 : f32 to vector<8x32xf32>
    %351 = arith.addf %349, %350 : vector<8x32xf32>
    %352 = arith.mulf %345, %328 : vector<8x32xf32>
    %353 = arith.mulf %340, %346 : vector<8x32xf32>
    %354 = arith.addf %352, %353 : vector<8x32xf32>
    %355 = math.tanh %354 : vector<8x32xf32>
    %356 = arith.mulf %351, %355 : vector<8x32xf32>
    %357 = vector.extract_strided_slice %224 {offsets = [40, 0], sizes = [8, 128], strides = [1, 1]} : vector<64x128xf32> to vector<8x128xf32>
    %358 = arith.truncf %356 : vector<8x32xf32> to vector<8x32xbf16>
    %cst_109 = arith.constant dense<0.000000e+00> : vector<8x128xf32>
    %359 = tpu.matmul %358, %219, %cst_109 {dimension_numbers = #tpu.dot_dimension_numbers<[1], [0], [0], [1], [0, 0, 1, 1], [], []>} : vector<8x32xbf16>, vector<32x128xbf16>, vector<8x128xf32> -> vector<8x128xf32>
    %360 = arith.addf %357, %359 : vector<8x128xf32>
    %361 = math.tanh %360 : vector<8x128xf32>
    %362 = vector.extract_strided_slice %361 {offsets = [0, 0], sizes = [8, 32], strides = [1, 1]} : vector<8x128xf32> to vector<8x32xf32>
    %cst_110 = arith.constant 5.000000e-01 : f32
    %363 = vector.broadcast %cst_110 : f32 to vector<8x32xf32>
    %364 = arith.mulf %363, %362 : vector<8x32xf32>
    %cst_111 = arith.constant 5.000000e-01 : f32
    %365 = vector.broadcast %cst_111 : f32 to vector<8x32xf32>
    %366 = arith.addf %364, %365 : vector<8x32xf32>
    %367 = vector.extract_strided_slice %361 {offsets = [0, 32], sizes = [8, 32], strides = [1, 1]} : vector<8x128xf32> to vector<8x32xf32>
    %cst_112 = arith.constant 5.000000e-01 : f32
    %368 = vector.broadcast %cst_112 : f32 to vector<8x32xf32>
    %369 = arith.mulf %368, %367 : vector<8x32xf32>
    %cst_113 = arith.constant 5.000000e-01 : f32
    %370 = vector.broadcast %cst_113 : f32 to vector<8x32xf32>
    %371 = arith.addf %369, %370 : vector<8x32xf32>
    %372 = vector.extract_strided_slice %361 {offsets = [0, 64], sizes = [8, 32], strides = [1, 1]} : vector<8x128xf32> to vector<8x32xf32>
    %373 = vector.extract_strided_slice %361 {offsets = [0, 96], sizes = [8, 32], strides = [1, 1]} : vector<8x128xf32> to vector<8x32xf32>
    %cst_114 = arith.constant 5.000000e-01 : f32
    %374 = vector.broadcast %cst_114 : f32 to vector<8x32xf32>
    %375 = arith.mulf %374, %373 : vector<8x32xf32>
    %cst_115 = arith.constant 5.000000e-01 : f32
    %376 = vector.broadcast %cst_115 : f32 to vector<8x32xf32>
    %377 = arith.addf %375, %376 : vector<8x32xf32>
    %378 = arith.mulf %371, %354 : vector<8x32xf32>
    %379 = arith.mulf %366, %372 : vector<8x32xf32>
    %380 = arith.addf %378, %379 : vector<8x32xf32>
    %381 = math.tanh %380 : vector<8x32xf32>
    %382 = arith.mulf %377, %381 : vector<8x32xf32>
    %383 = vector.extract_strided_slice %224 {offsets = [48, 0], sizes = [8, 128], strides = [1, 1]} : vector<64x128xf32> to vector<8x128xf32>
    %384 = arith.truncf %382 : vector<8x32xf32> to vector<8x32xbf16>
    %cst_116 = arith.constant dense<0.000000e+00> : vector<8x128xf32>
    %385 = tpu.matmul %384, %219, %cst_116 {dimension_numbers = #tpu.dot_dimension_numbers<[1], [0], [0], [1], [0, 0, 1, 1], [], []>} : vector<8x32xbf16>, vector<32x128xbf16>, vector<8x128xf32> -> vector<8x128xf32>
    %386 = arith.addf %383, %385 : vector<8x128xf32>
    %387 = math.tanh %386 : vector<8x128xf32>
    %388 = vector.extract_strided_slice %387 {offsets = [0, 0], sizes = [8, 32], strides = [1, 1]} : vector<8x128xf32> to vector<8x32xf32>
    %cst_117 = arith.constant 5.000000e-01 : f32
    %389 = vector.broadcast %cst_117 : f32 to vector<8x32xf32>
    %390 = arith.mulf %389, %388 : vector<8x32xf32>
    %cst_118 = arith.constant 5.000000e-01 : f32
    %391 = vector.broadcast %cst_118 : f32 to vector<8x32xf32>
    %392 = arith.addf %390, %391 : vector<8x32xf32>
    %393 = vector.extract_strided_slice %387 {offsets = [0, 32], sizes = [8, 32], strides = [1, 1]} : vector<8x128xf32> to vector<8x32xf32>
    %cst_119 = arith.constant 5.000000e-01 : f32
    %394 = vector.broadcast %cst_119 : f32 to vector<8x32xf32>
    %395 = arith.mulf %394, %393 : vector<8x32xf32>
    %cst_120 = arith.constant 5.000000e-01 : f32
    %396 = vector.broadcast %cst_120 : f32 to vector<8x32xf32>
    %397 = arith.addf %395, %396 : vector<8x32xf32>
    %398 = vector.extract_strided_slice %387 {offsets = [0, 64], sizes = [8, 32], strides = [1, 1]} : vector<8x128xf32> to vector<8x32xf32>
    %399 = vector.extract_strided_slice %387 {offsets = [0, 96], sizes = [8, 32], strides = [1, 1]} : vector<8x128xf32> to vector<8x32xf32>
    %cst_121 = arith.constant 5.000000e-01 : f32
    %400 = vector.broadcast %cst_121 : f32 to vector<8x32xf32>
    %401 = arith.mulf %400, %399 : vector<8x32xf32>
    %cst_122 = arith.constant 5.000000e-01 : f32
    %402 = vector.broadcast %cst_122 : f32 to vector<8x32xf32>
    %403 = arith.addf %401, %402 : vector<8x32xf32>
    %404 = arith.mulf %397, %380 : vector<8x32xf32>
    %405 = arith.mulf %392, %398 : vector<8x32xf32>
    %406 = arith.addf %404, %405 : vector<8x32xf32>
    %407 = math.tanh %406 : vector<8x32xf32>
    %408 = arith.mulf %403, %407 : vector<8x32xf32>
    %409 = vector.extract_strided_slice %224 {offsets = [56, 0], sizes = [8, 128], strides = [1, 1]} : vector<64x128xf32> to vector<8x128xf32>
    %410 = arith.truncf %408 : vector<8x32xf32> to vector<8x32xbf16>
    %cst_123 = arith.constant dense<0.000000e+00> : vector<8x128xf32>
    %411 = tpu.matmul %410, %219, %cst_123 {dimension_numbers = #tpu.dot_dimension_numbers<[1], [0], [0], [1], [0, 0, 1, 1], [], []>} : vector<8x32xbf16>, vector<32x128xbf16>, vector<8x128xf32> -> vector<8x128xf32>
    %412 = arith.addf %409, %411 : vector<8x128xf32>
    %413 = math.tanh %412 : vector<8x128xf32>
    %414 = vector.extract_strided_slice %413 {offsets = [0, 0], sizes = [8, 32], strides = [1, 1]} : vector<8x128xf32> to vector<8x32xf32>
    %cst_124 = arith.constant 5.000000e-01 : f32
    %415 = vector.broadcast %cst_124 : f32 to vector<8x32xf32>
    %416 = arith.mulf %415, %414 : vector<8x32xf32>
    %cst_125 = arith.constant 5.000000e-01 : f32
    %417 = vector.broadcast %cst_125 : f32 to vector<8x32xf32>
    %418 = arith.addf %416, %417 : vector<8x32xf32>
    %419 = vector.extract_strided_slice %413 {offsets = [0, 32], sizes = [8, 32], strides = [1, 1]} : vector<8x128xf32> to vector<8x32xf32>
    %cst_126 = arith.constant 5.000000e-01 : f32
    %420 = vector.broadcast %cst_126 : f32 to vector<8x32xf32>
    %421 = arith.mulf %420, %419 : vector<8x32xf32>
    %cst_127 = arith.constant 5.000000e-01 : f32
    %422 = vector.broadcast %cst_127 : f32 to vector<8x32xf32>
    %423 = arith.addf %421, %422 : vector<8x32xf32>
    %424 = vector.extract_strided_slice %413 {offsets = [0, 64], sizes = [8, 32], strides = [1, 1]} : vector<8x128xf32> to vector<8x32xf32>
    %425 = vector.extract_strided_slice %413 {offsets = [0, 96], sizes = [8, 32], strides = [1, 1]} : vector<8x128xf32> to vector<8x32xf32>
    %cst_128 = arith.constant 5.000000e-01 : f32
    %426 = vector.broadcast %cst_128 : f32 to vector<8x32xf32>
    %427 = arith.mulf %426, %425 : vector<8x32xf32>
    %cst_129 = arith.constant 5.000000e-01 : f32
    %428 = vector.broadcast %cst_129 : f32 to vector<8x32xf32>
    %429 = arith.addf %427, %428 : vector<8x32xf32>
    %430 = arith.mulf %423, %406 : vector<8x32xf32>
    %431 = arith.mulf %418, %424 : vector<8x32xf32>
    %432 = arith.addf %430, %431 : vector<8x32xf32>
    %433 = math.tanh %432 : vector<8x32xf32>
    %434 = arith.mulf %429, %433 : vector<8x32xf32>
    %435 = arith.truncf %434 : vector<8x32xf32> to vector<8x32xbf16>
    %c0_130 = arith.constant 0 : index
    %c0_131 = arith.constant 0 : index
    %436 = vector.load %arg8[%c0_130, %c0_131] : memref<32x128xbf16, #tpu.memory_space<vmem>>, vector<32x128xbf16>
    %cst_132 = arith.constant dense<0.000000e+00> : vector<8x128xf32>
    %437 = tpu.matmul %435, %436, %cst_132 {dimension_numbers = #tpu.dot_dimension_numbers<[1], [0], [0], [1], [0, 0, 1, 1], [], []>} : vector<8x32xbf16>, vector<32x128xbf16>, vector<8x128xf32> -> vector<8x128xf32>
    %c0_133 = arith.constant 0 : index
    %c0_134 = arith.constant 0 : index
    %438 = vector.load %arg10[%c0_133, %c0_134] : memref<1x128xf32, #tpu.memory_space<vmem>>, vector<1x128xf32>
    %439 = vector.broadcast %438 : vector<1x128xf32> to vector<8x128xf32>
    %440 = arith.addf %437, %439 : vector<8x128xf32>
    %c0_135 = arith.constant 0 : index
    %c0_136 = arith.constant 0 : index
    %441 = vector.load %arg1[%c0_135, %c0_136] : memref<8x8xf32, #tpu.memory_space<vmem>>, vector<8x8xf32>
    %c0_137 = arith.constant 0 : index
    %c0_138 = arith.constant 0 : index
    %442 = vector.load %arg9[%c0_137, %c0_138] : memref<3x128xf32, #tpu.memory_space<vmem>>, vector<3x128xf32>
    %443 = vector.extract_strided_slice %441 {offsets = [0, 0], sizes = [8, 1], strides = [1, 1]} : vector<8x8xf32> to vector<8x1xf32>
    %444 = vector.extract_strided_slice %442 {offsets = [0, 0], sizes = [1, 128], strides = [1, 1]} : vector<3x128xf32> to vector<1x128xf32>
    %445 = vector.broadcast %443 : vector<8x1xf32> to vector<8x128xf32>
    %446 = vector.broadcast %444 : vector<1x128xf32> to vector<8x128xf32>
    %447 = arith.mulf %445, %446 : vector<8x128xf32>
    %448 = arith.addf %440, %447 : vector<8x128xf32>
    %449 = vector.extract_strided_slice %441 {offsets = [0, 1], sizes = [8, 1], strides = [1, 1]} : vector<8x8xf32> to vector<8x1xf32>
    %450 = vector.extract_strided_slice %442 {offsets = [1, 0], sizes = [1, 128], strides = [1, 1]} : vector<3x128xf32> to vector<1x128xf32>
    %451 = vector.broadcast %449 : vector<8x1xf32> to vector<8x128xf32>
    %452 = vector.broadcast %450 : vector<1x128xf32> to vector<8x128xf32>
    %453 = arith.mulf %451, %452 : vector<8x128xf32>
    %454 = arith.addf %448, %453 : vector<8x128xf32>
    %455 = vector.extract_strided_slice %441 {offsets = [0, 2], sizes = [8, 1], strides = [1, 1]} : vector<8x8xf32> to vector<8x1xf32>
    %456 = vector.extract_strided_slice %442 {offsets = [2, 0], sizes = [1, 128], strides = [1, 1]} : vector<3x128xf32> to vector<1x128xf32>
    %457 = vector.broadcast %455 : vector<8x1xf32> to vector<8x128xf32>
    %458 = vector.broadcast %456 : vector<1x128xf32> to vector<8x128xf32>
    %459 = arith.mulf %457, %458 : vector<8x128xf32>
    %460 = arith.addf %454, %459 : vector<8x128xf32>
    %c0_139 = arith.constant 0 : index
    %c0_140 = arith.constant 0 : index
    %461 = vector.load %arg11[%c0_139, %c0_140] : memref<8x128xf32, #tpu.memory_space<vmem>>, vector<8x128xf32>
    tpu.vector_store %arg11[%c0_139, %c0_140], %460 {strides = array<i32>} : memref<8x128xf32, #tpu.memory_space<vmem>>, vector<8x128xf32>,
    return
  }
}

</mosaic_0001>

<llo_original>
// kernel: tpu_custom_call.1
$region0: #{tpu_custom_call.1}
  #allocation0 [shape = 'u32[]', space=smem, size = 0x4, offset = 0x4, fixed_abs, tag = 'smem constant byte address 0x4 - core index']
  #allocation1 [shape = 'u32[144,128]{1,0:T(1,128)}', space=vmem, size = 0x12000, scoped, tag = 'internal scratch']
  %s0 = inlined_call_operand.vmem [shape: f32[64,8], index: 0, kind: input, shape index: {}]
  %s1 = inlined_call_operand.vmem [shape: f32[8,8], index: 1, kind: input, shape index: {}]
  %s2 = inlined_call_operand.hbm [shape: f32[8,128], index: 2, kind: input, shape index: {}]
  %s3 = inlined_call_operand.vmem [shape: bf16[32,128], index: 3, kind: input, shape index: {}]
  %s4 = inlined_call_operand.vmem [shape: f32[1,128], index: 4, kind: input, shape index: {}]
  %s5 = inlined_call_operand.vmem [shape: bf16[32,128], index: 5, kind: input, shape index: {}]
  %s6 = inlined_call_operand.vmem [shape: bf16[32,128], index: 6, kind: input, shape index: {}]
  %s7 = inlined_call_operand.vmem [shape: f32[1,128], index: 7, kind: input, shape index: {}]
  %s8 = inlined_call_operand.vmem [shape: bf16[32,128], index: 8, kind: input, shape index: {}]
  %s9 = inlined_call_operand.vmem [shape: f32[3,128], index: 9, kind: input, shape index: {}]
  %s10 = inlined_call_operand.vmem [shape: f32[1,128], index: 10, kind: input, shape index: {}]
  %s11 = inlined_call_operand.hbm [shape: f32[8,128], index: 11, kind: output, shape index: {}]
  %s12 = sld [smem:[#allocation0]]
  $region58: #{tpu_custom_call.1} parent=0
    _
  %s14 = ssub.s32 1, %s12
  %s15 = scalar_select 0, %s14, %s12
  $region1: #{tpu_custom_call.1} parent=0
    #allocation2 [shape = 'u8[4096]{0}', space=vmem, size = 0x1000, scoped, tag = 'input window, operand 2, single buffered']
    #allocation3 [shape = 's32[1]{0}', space=sflag, size = 0x4, scoped, tag = 'scoped memory for tpu_custom_call.1']
    #allocation4 [shape = 's32[1]{0}', space=sflag, size = 0x4, scoped, tag = 'scoped memory for tpu_custom_call.1']
    #allocation5 [shape = 'u8[4096]{0}', space=vmem, size = 0x1000, scoped, tag = 'output window, operand 0, single buffered']
    %16 = vsyncpa [#allocation3], 0
    %17 = vsyncpa [#allocation4], 0
    // Predicated region
    $region2: #{tpu_custom_call.1} parent=1 // pred_check
      _
    $region3: #{tpu_custom_call.1} parent=1 // pred_check_branch
      %19 = sbr.rel (0) target = $region5
    $region4: #{tpu_custom_call.1} parent=1 // pred_region
      _
    $region5: #{tpu_custom_call.1} parent=1 // pred_fallthru
      _
    // Predicated region
    $region6: #{tpu_custom_call.1} parent=1 // pred_check
      _
    $region7: #{tpu_custom_call.1} parent=1 // pred_check_branch
      %21 = sbr.rel (0) target = $region9
    $region8: #{tpu_custom_call.1} parent=1 // pred_region
      _
    $region9: #{tpu_custom_call.1} parent=1 // pred_fallthru
      _
    // Predicated region
    $region10: #{tpu_custom_call.1} parent=1 // pred_check
      _
    $region11: #{tpu_custom_call.1} parent=1 // pred_check_branch
      %23 = sbr.rel (0) target = $region13
    $region12: #{tpu_custom_call.1} parent=1 // pred_region
      %s25 = ssub.s32 128, 128
      %26 = vsyncadd [#allocation3], %s25
      %s28 = sshll.u32 [#allocation2], 4
      %s29 = int_to_ptr.vmem [resolvable:$true] %s28
      %31 = dma.hbm_to_vmem [thread:$0]  %s2, 128, %s29, [#allocation3]
    $region13: #{tpu_custom_call.1} parent=1 // pred_fallthru
      _
    // Predicated region
    $region14: #{tpu_custom_call.1} parent=1 // pred_check
      _
    $region15: #{tpu_custom_call.1} parent=1 // pred_check_branch
      %33 = sbr.rel (0) target = $region17
    $region16: #{tpu_custom_call.1} parent=1 // pred_region
      _
    $region17: #{tpu_custom_call.1} parent=1 // pred_fallthru
      _
    // Predicated region
    $region18: #{tpu_custom_call.1} parent=1 // pred_check
      _
    $region19: #{tpu_custom_call.1} parent=1 // pred_check_branch
      %35 = sbr.rel (0) target = $region21
    $region20: #{tpu_custom_call.1} parent=1 // pred_region
      _
    $region21: #{tpu_custom_call.1} parent=1 // pred_fallthru
      _
    // Predicated region
    $region22: #{tpu_custom_call.1} parent=1 // pred_check
      _
    $region23: #{tpu_custom_call.1} parent=1 // pred_check_branch
      %37 = sbr.rel (0) target = $region25
    $region24: #{tpu_custom_call.1} parent=1 // pred_region
      _
    $region25: #{tpu_custom_call.1} parent=1 // pred_fallthru
      _
    // Predicated region
    $region26: #{tpu_custom_call.1} parent=1 // pred_check
      _
    $region27: #{tpu_custom_call.1} parent=1 // pred_check_branch
      %39 = sbr.rel (0) target = $region29
    $region28: #{tpu_custom_call.1} parent=1 // pred_region
      _
    $region29: #{tpu_custom_call.1} parent=1 // pred_fallthru
      _
    // Predicated region
    $region30: #{tpu_custom_call.1} parent=1 // pred_check
      _
    $region31: #{tpu_custom_call.1} parent=1 // pred_check_branch
      %41 = sbr.rel (0) target = $region33
    $region32: #{tpu_custom_call.1} parent=1 // pred_region
      _
    $region33: #{tpu_custom_call.1} parent=1 // pred_fallthru
      _
    // Predicated region
    $region34: #{tpu_custom_call.1} parent=1 // pred_check
      _
    $region35: #{tpu_custom_call.1} parent=1 // pred_check_branch
      %43 = sbr.rel (0) target = $region37
    $region36: #{tpu_custom_call.1} parent=1 // pred_region
      _
    $region37: #{tpu_custom_call.1} parent=1 // pred_fallthru
      _
    // Predicated region
    $region38: #{tpu_custom_call.1} parent=1 // pred_check
      _
    $region39: #{tpu_custom_call.1} parent=1 // pred_check_branch
      %45 = sbr.rel (0) target = $region41
    $region40: #{tpu_custom_call.1} parent=1 // pred_region
      _
    $region41: #{tpu_custom_call.1} parent=1 // pred_fallthru
      _
    // Predicated region
    $region42: #{tpu_custom_call.1} parent=1 // pred_check
      _
    $region43: #{tpu_custom_call.1} parent=1 // pred_check_branch
      %47 = sbr.rel (0) target = $region45
    $region44: #{tpu_custom_call.1} parent=1 // pred_region
      _
    $region45: #{tpu_custom_call.1} parent=1 // pred_fallthru
      _
    // Predicated region
    $region46: #{tpu_custom_call.1} parent=1 // pred_check
      _
    $region47: #{tpu_custom_call.1} parent=1 // pred_check_branch
      %49 = sbr.rel (0) target = $region49
    $region48: #{tpu_custom_call.1} parent=1 // pred_region
      %50 = dma.done [#allocation3], 128
    $region49: #{tpu_custom_call.1} parent=1 // pred_fallthru
      _
    %v52 = vld [vmem:[%s0] sm:$0xff]
    %v53 = vld [vmem:[%s0 + $0x8] sm:$0xff]
    %v54 = vld [vmem:[%s0 + $0x10] sm:$0xff]
    %v55 = vld [vmem:[%s0 + $0x18] sm:$0xff]
    %v56 = vld [vmem:[%s0 + $0x20] sm:$0xff]
    %v57 = vld [vmem:[%s0 + $0x28] sm:$0xff]
    %v58 = vld [vmem:[%s0 + $0x30] sm:$0xff]
    %v59 = vld [vmem:[%s0 + $0x38] sm:$0xff]
    %v60 = vld [vmem:[#allocation2] sm:$0xff]
    %v61 = vld [vmem:[%s3] sm:$0xf]
    %v62 = vld [vmem:[%s3 + $0x4] sm:$0xf]
    %v63 = vld [vmem:[%s3 + $0x8] sm:$0xf]
    %v64 = vld [vmem:[%s3 + $0xc] sm:$0xf]
    %v65 = vld [vmem:[%s4] sm:$0x1]
    %v67 = vlaneseq
    %v68 = vshrl.u32 %v67, 7
    %v69 = vsub.s32 0, %v68
    %v70 = vrot.slane %v65, %v69
    %vm72 = vcmask 64512
    %v74 = vsel %vm72, %v52, 0
    %v77 = vsel %vm72, %v53, 0
    %v80 = vsel %vm72, %v54, 0
    %v83 = vsel %vm72, %v55, 0
    %v86 = vsel %vm72, %v56, 0
    %v89 = vsel %vm72, %v57, 0
    %v92 = vsel %vm72, %v58, 0
    %v95 = vsel %vm72, %v59, 0
    %97 = vmatprep.subr.mxu0 0.0
    %98 = vmatpush1.msra.mxu0 %v60
    %99 = vmatprep.subr.mxu0 0.0
    %100 = vmatpush1.msra.mxu0 0.0
    %101 = vmatprep.subr.mxu0 0.0
    %102 = vmatpush1.msra.mxu0 0.0
    %103 = vmatprep.subr.mxu0 0.0
    %104 = vmatpush1.msra.mxu0 0.0
    %105 = vmatprep.subr.mxu0 0.0
    %106 = vmatpush1.msra.mxu0 0.0
    %107 = vmatprep.subr.mxu0 0.0
    %108 = vmatpush1.msra.mxu0 0.0
    %109 = vmatprep.subr.mxu0 0.0
    %110 = vmatpush1.msra.mxu0 0.0
    %111 = vmatprep.subr.mxu0 0.0
    %112 = vmatpush1.msra.mxu0 0.0
    %113 = vmatprep.subr.mxu0 0.0
    %114 = vmatpush1.msra.mxu0 0.0
    %115 = vmatprep.subr.mxu0 0.0
    %116 = vmatpush1.msra.mxu0 0.0
    %117 = vmatprep.subr.mxu0 0.0
    %118 = vmatpush1.msra.mxu0 0.0
    %119 = vmatprep.subr.mxu0 0.0
    %120 = vmatpush1.msra.mxu0 0.0
    %121 = vmatprep.subr.mxu0 0.0
    %122 = vmatpush1.msra.mxu0 0.0
    %123 = vmatprep.subr.mxu0 0.0
    %124 = vmatpush1.msra.mxu0 0.0
    %125 = vmatprep.subr.mxu0 0.0
    %126 = vmatpush1.msra.mxu0 0.0
    %127 = vmatprep.subr.mxu0 0.0
    %128 = vmatpush1.msra.mxu0 0.0
    %129 = vmatprep.subr.mxu0 0.0
    %130 = vmatpush1.msra.mxu0 0.0
    %131 = vmatprep.subr.mxu0 0.0
    %132 = vmatpush1.msra.mxu0 0.0
    %133 = vmatprep.subr.mxu0 0.0
    %134 = vmatpush1.msra.mxu0 0.0
    %135 = vmatprep.subr.mxu0 0.0
    %136 = vmatpush1.msra.mxu0 0.0
    %137 = vmatprep.subr.mxu0 0.0
    %138 = vmatpush1.msra.mxu0 0.0
    %139 = vmatprep.subr.mxu0 0.0
    %140 = vmatpush1.msra.mxu0 0.0
    %141 = vmatprep.subr.mxu0 0.0
    %142 = vmatpush1.msra.mxu0 0.0
    %143 = vmatprep.subr.mxu0 0.0
    %144 = vmatpush1.msra.mxu0 0.0
    %145 = vmatprep.subr.mxu0 0.0
    %146 = vmatpush1.msra.mxu0 0.0
    %147 = vmatprep.subr.mxu0 0.0
    %148 = vmatpush1.msra.mxu0 0.0
    %149 = vmatprep.subr.mxu0 0.0
    %150 = vmatpush1.msra.mxu0 0.0
    %151 = vmatprep.subr.mxu0 0.0
    %152 = vmatpush1.msra.mxu0 0.0
    %153 = vmatprep.subr.mxu0 0.0
    %154 = vmatpush1.msra.mxu0 0.0
    %155 = vmatprep.subr.mxu0 0.0
    %156 = vmatpush1.msra.mxu0 0.0
    %157 = vmatprep.subr.mxu0 0.0
    %158 = vmatpush1.msra.mxu0 0.0
    %159 = vmatprep.subr.mxu0 0.0
    %160 = vmatpush1.msra.mxu0 0.0
    %161 = vmatprep.mubr.f32.mxu0 0.0
    %162 = vmatmul.mubr.f32.gmra.mrb[0].mxu0 %v74
    %v163 = vpop.f32.mrb[0].mxu0
    %v164 = vadd.f32 %v70, %v163
    %v165 = vpop.f32.mrb[0].mxu0
    %166 = vmatprep.mubr.f32.mxu0 0.0
    %167 = vmatmul.mubr.f32.gmra.mrb[0].mxu0 %v77
    %v168 = vpop.f32.mrb[0].mxu0
    %v169 = vadd.f32 %v70, %v168
    %v170 = vpop.f32.mrb[0].mxu0
    %171 = vmatprep.mubr.f32.mxu0 0.0
    %172 = vmatmul.mubr.f32.gmra.mrb[0].mxu0 %v80
    %v173 = vpop.f32.mrb[0].mxu0
    %v174 = vadd.f32 %v70, %v173
    %v175 = vpop.f32.mrb[0].mxu0
    %176 = vmatprep.mubr.f32.mxu0 0.0
    %177 = vmatmul.mubr.f32.gmra.mrb[0].mxu0 %v83
    %v178 = vpop.f32.mrb[0].mxu0
    %v179 = vadd.f32 %v70, %v178
    %v180 = vpop.f32.mrb[0].mxu0
    %181 = vmatprep.mubr.f32.mxu0 0.0
    %182 = vmatmul.mubr.f32.gmra.mrb[0].mxu0 %v86
    %v183 = vpop.f32.mrb[0].mxu0
    %v184 = vadd.f32 %v70, %v183
    %v185 = vpop.f32.mrb[0].mxu0
    %186 = vmatprep.mubr.f32.mxu0 0.0
    %187 = vmatmul.mubr.f32.gmra.mrb[0].mxu0 %v89
    %v188 = vpop.f32.mrb[0].mxu0
    %v189 = vadd.f32 %v70, %v188
    %v190 = vpop.f32.mrb[0].mxu0
    %191 = vmatprep.mubr.f32.mxu0 0.0
    %192 = vmatmul.mubr.f32.gmra.mrb[0].mxu0 %v92
    %v193 = vpop.f32.mrb[0].mxu0
    %v194 = vadd.f32 %v70, %v193
    %v195 = vpop.f32.mrb[0].mxu0
    %196 = vmatprep.mubr.f32.mxu0 0.0
    %197 = vmatmul.mubr.f32.gmra.mrb[0].mxu0 %v95
    %v198 = vpop.f32.mrb[0].mxu0
    %v199 = vadd.f32 %v70, %v198
    %v200 = vpop.f32.mrb[0].mxu0
    %201 = vdwg.mxu0
    %v206 = vunpack.c.l.b16 %v61
    %v207 = vunpack.c.l.b16 %v62
    %v208 = vunpack.c.l.b16 %v63
    %v209 = vunpack.c.l.b16 %v64
    %v210 = vpack.c.b16 %v207, %v206
    %v211 = vpack.c.b16 %v209, %v208
    %vm214 = vcmask 261120
    %v216 = vsel %vm214, 0, 0
    %218 = vmatprep.subr.bf16.mxu0 0
    %219 = vmatpush1.bf16.msra.mxu0 %v210
    %220 = vmatprep.subr.bf16.mxu0 0
    %221 = vmatpush1.bf16.msra.mxu0 %v211
    %222 = vmatprep.subr.bf16.mxu0 0
    %223 = vmatpush1.bf16.msra.mxu0 0
    %224 = vmatprep.subr.bf16.mxu0 0
    %225 = vmatpush1.bf16.msra.mxu0 0
    %226 = vmatprep.subr.bf16.mxu0 0
    %227 = vmatpush1.bf16.msra.mxu0 0
    %228 = vmatprep.subr.bf16.mxu0 0
    %229 = vmatpush1.bf16.msra.mxu0 0
    %230 = vmatprep.subr.bf16.mxu0 0
    %231 = vmatpush1.bf16.msra.mxu0 0
    %232 = vmatprep.subr.bf16.mxu0 0
    %233 = vmatpush1.bf16.msra.mxu0 0
    %234 = vmatprep.subr.bf16.mxu0 0
    %235 = vmatpush1.bf16.msra.mxu0 0
    %236 = vmatprep.subr.bf16.mxu0 0
    %237 = vmatpush1.bf16.msra.mxu0 0
    %238 = vmatprep.subr.bf16.mxu0 0
    %239 = vmatpush1.bf16.msra.mxu0 0
    %240 = vmatprep.subr.bf16.mxu0 0
    %241 = vmatpush1.bf16.msra.mxu0 0
    %242 = vmatprep.subr.bf16.mxu0 0
    %243 = vmatpush1.bf16.msra.mxu0 0
    %244 = vmatprep.subr.bf16.mxu0 0
    %245 = vmatpush1.bf16.msra.mxu0 0
    %246 = vmatprep.subr.bf16.mxu0 0
    %247 = vmatpush1.bf16.msra.mxu0 0
    %248 = vmatprep.subr.bf16.mxu0 0
    %249 = vmatpush1.bf16.msra.mxu0 0
    %250 = vmatprep.mubr.bf16.mxu0 0
    %251 = vmatmul.mubr.bf16.gmra.mrb[0].mxu0 %v216
    %v252 = vpop.f32.mrb[0].mxu0
    %v253 = vadd.f32 0.0, %v252
    %v254 = vpop.f32.mrb[0].mxu0
    %v255 = vpop.f32.mrb[0].mxu0
    %v256 = vpop.f32.mrb[0].mxu0
    %257 = vdwg.mxu0
    %v258 = vadd.f32 %v164, %v253
    %v259 = vtanh.pop %v258
    %v260 = vmul.f32 %v259, 0.5
    %v261 = vadd.f32 %v260, 0.5
    %v262 = vmul.f32 %v261, 0.0
    %264 = vrot.lane.b32.xlu0 %v259, 64
    %v265 = vpop.permute.xlu0 %264
    %v267 = vmul.f32 %v261, %v265
    %269 = vrot.lane.b32.xlu0 %v267, 32
    %v270 = vpop.permute.xlu0 %269
    %v272 = vadd.f32 %v262, %v270
    %v273 = vtanh.pop %v272
    %275 = vrot.lane.b32.xlu0 %v273, 64
    %v276 = vpop.permute.xlu0 %275
    %v278 = vmul.f32 %v261, %v276
    %v279 = vpack.c.bf16 %v278, %v278
    %281 = vrot.lane.b32.xlu0 %v279, 32
    %v282 = vpop.permute.xlu0 %281
    %v284 = vsel %vm214, %v282, 0
    %286 = vmatprep.subr.bf16.mxu0 0
    %287 = vmatpush1.bf16.msra.mxu0 %v210
    %288 = vmatprep.subr.bf16.mxu0 0
    %289 = vmatpush1.bf16.msra.mxu0 %v211
    %290 = vmatprep.subr.bf16.mxu0 0
    %291 = vmatpush1.bf16.msra.mxu0 0
    %292 = vmatprep.subr.bf16.mxu0 0
    %293 = vmatpush1.bf16.msra.mxu0 0
    %294 = vmatprep.subr.bf16.mxu0 0
    %295 = vmatpush1.bf16.msra.mxu0 0
    %296 = vmatprep.subr.bf16.mxu0 0
    %297 = vmatpush1.bf16.msra.mxu0 0
    %298 = vmatprep.subr.bf16.mxu0 0
    %299 = vmatpush1.bf16.msra.mxu0 0
    %300 = vmatprep.subr.bf16.mxu0 0
    %301 = vmatpush1.bf16.msra.mxu0 0
    %302 = vmatprep.subr.bf16.mxu0 0
    %303 = vmatpush1.bf16.msra.mxu0 0
    %304 = vmatprep.subr.bf16.mxu0 0
    %305 = vmatpush1.bf16.msra.mxu0 0
    %306 = vmatprep.subr.bf16.mxu0 0
    %307 = vmatpush1.bf16.msra.mxu0 0
    %308 = vmatprep.subr.bf16.mxu0 0
    %309 = vmatpush1.bf16.msra.mxu0 0
    %310 = vmatprep.subr.bf16.mxu0 0
    %311 = vmatpush1.bf16.msra.mxu0 0
    %312 = vmatprep.subr.bf16.mxu0 0
    %313 = vmatpush1.bf16.msra.mxu0 0
    %314 = vmatprep.subr.bf16.mxu0 0
    %315 = vmatpush1.bf16.msra.mxu0 0
    %316 = vmatprep.subr.bf16.mxu0 0
    %317 = vmatpush1.bf16.msra.mxu0 0
    %318 = vmatprep.mubr.bf16.mxu0 0
    %319 = vmatmul.mubr.bf16.gmra.mrb[0].mxu0 %v284
    %v320 = vpop.f32.mrb[0].mxu0
    %v321 = vadd.f32 0.0, %v320
    %v322 = vpop.f32.mrb[0].mxu0
    %v323 = vpop.f32.mrb[0].mxu0
    %v324 = vpop.f32.mrb[0].mxu0
    %325 = vdwg.mxu0
    %v326 = vadd.f32 %v169, %v321
    %v327 = vtanh.pop %v326
    %v328 = vmul.f32 %v327, 0.5
    %v329 = vadd.f32 %v328, 0.5
    %v330 = vmul.f32 %v329, %v272
    %332 = vrot.lane.b32.xlu0 %v327, 64
    %v333 = vpop.permute.xlu0 %332
    %v335 = vmul.f32 %v329, %v333
    %337 = vrot.lane.b32.xlu0 %v335, 32
    %v338 = vpop.permute.xlu0 %337
    %v340 = vadd.f32 %v330, %v338
    %v341 = vtanh.pop %v340
    %343 = vrot.lane.b32.xlu0 %v341, 64
    %v344 = vpop.permute.xlu0 %343
    %v346 = vmul.f32 %v329, %v344
    %v347 = vpack.c.bf16 %v346, %v346
    %349 = vrot.lane.b32.xlu0 %v347, 32
    %v350 = vpop.permute.xlu0 %349
    %v352 = vsel %vm214, %v350, 0
    %354 = vmatprep.subr.bf16.mxu0 0
    %355 = vmatpush1.bf16.msra.mxu0 %v210
    %356 = vmatprep.subr.bf16.mxu0 0
    %357 = vmatpush1.bf16.msra.mxu0 %v211
    %358 = vmatprep.subr.bf16.mxu0 0
    %359 = vmatpush1.bf16.msra.mxu0 0
    %360 = vmatprep.subr.bf16.mxu0 0
    %361 = vmatpush1.bf16.msra.mxu0 0
    %362 = vmatprep.subr.bf16.mxu0 0
    %363 = vmatpush1.bf16.msra.mxu0 0
    %364 = vmatprep.subr.bf16.mxu0 0
    %365 = vmatpush1.bf16.msra.mxu0 0
    %366 = vmatprep.subr.bf16.mxu0 0
    %367 = vmatpush1.bf16.msra.mxu0 0
    %368 = vmatprep.subr.bf16.mxu0 0
    %369 = vmatpush1.bf16.msra.mxu0 0
    %370 = vmatprep.subr.bf16.mxu0 0
    %371 = vmatpush1.bf16.msra.mxu0 0
    %372 = vmatprep.subr.bf16.mxu0 0
    %373 = vmatpush1.bf16.msra.mxu0 0
    %374 = vmatprep.subr.bf16.mxu0 0
    %375 = vmatpush1.bf16.msra.mxu0 0
    %376 = vmatprep.subr.bf16.mxu0 0
    %377 = vmatpush1.bf16.msra.mxu0 0
    %378 = vmatprep.subr.bf16.mxu0 0
    %379 = vmatpush1.bf16.msra.mxu0 0
    %380 = vmatprep.subr.bf16.mxu0 0
    %381 = vmatpush1.bf16.msra.mxu0 0
    %382 = vmatprep.subr.bf16.mxu0 0
    %383 = vmatpush1.bf16.msra.mxu0 0
    %384 = vmatprep.subr.bf16.mxu0 0
    %385 = vmatpush1.bf16.msra.mxu0 0
    %386 = vmatprep.mubr.bf16.mxu0 0
    %387 = vmatmul.mubr.bf16.gmra.mrb[0].mxu0 %v352
    %v388 = vpop.f32.mrb[0].mxu0
    %v389 = vadd.f32 0.0, %v388
    %v390 = vpop.f32.mrb[0].mxu0
    %v391 = vpop.f32.mrb[0].mxu0
    %v392 = vpop.f32.mrb[0].mxu0
    %393 = vdwg.mxu0
    %v394 = vadd.f32 %v174, %v389
    %v395 = vtanh.pop %v394
    %v396 = vmul.f32 %v395, 0.5
    %v397 = vadd.f32 %v396, 0.5
    %v398 = vmul.f32 %v397, %v340
    %400 = vrot.lane.b32.xlu0 %v395, 64
    %v401 = vpop.permute.xlu0 %400
    %v403 = vmul.f32 %v397, %v401
    %405 = vrot.lane.b32.xlu0 %v403, 32
    %v406 = vpop.permute.xlu0 %405
    %v408 = vadd.f32 %v398, %v406
    %v409 = vtanh.pop %v408
    %411 = vrot.lane.b32.xlu0 %v409, 64
    %v412 = vpop.permute.xlu0 %411
    %v414 = vmul.f32 %v397, %v412
    %v415 = vpack.c.bf16 %v414, %v414
    %417 = vrot.lane.b32.xlu0 %v415, 32
    %v418 = vpop.permute.xlu0 %417
    %v420 = vsel %vm214, %v418, 0
    %422 = vmatprep.subr.bf16.mxu0 0
    %423 = vmatpush1.bf16.msra.mxu0 %v210
    %424 = vmatprep.subr.bf16.mxu0 0
    %425 = vmatpush1.bf16.msra.mxu0 %v211
    %426 = vmatprep.subr.bf16.mxu0 0
    %427 = vmatpush1.bf16.msra.mxu0 0
    %428 = vmatprep.subr.bf16.mxu0 0
    %429 = vmatpush1.bf16.msra.mxu0 0
    %430 = vmatprep.subr.bf16.mxu0 0
    %431 = vmatpush1.bf16.msra.mxu0 0
    %432 = vmatprep.subr.bf16.mxu0 0
    %433 = vmatpush1.bf16.msra.mxu0 0
    %434 = vmatprep.subr.bf16.mxu0 0
    %435 = vmatpush1.bf16.msra.mxu0 0
    %436 = vmatprep.subr.bf16.mxu0 0
    %437 = vmatpush1.bf16.msra.mxu0 0
    %438 = vmatprep.subr.bf16.mxu0 0
    %439 = vmatpush1.bf16.msra.mxu0 0
    %440 = vmatprep.subr.bf16.mxu0 0
    %441 = vmatpush1.bf16.msra.mxu0 0
    %442 = vmatprep.subr.bf16.mxu0 0
    %443 = vmatpush1.bf16.msra.mxu0 0
    %444 = vmatprep.subr.bf16.mxu0 0
    %445 = vmatpush1.bf16.msra.mxu0 0
    %446 = vmatprep.subr.bf16.mxu0 0
    %447 = vmatpush1.bf16.msra.mxu0 0
    %448 = vmatprep.subr.bf16.mxu0 0
    %449 = vmatpush1.bf16.msra.mxu0 0
    %450 = vmatprep.subr.bf16.mxu0 0
    %451 = vmatpush1.bf16.msra.mxu0 0
    %452 = vmatprep.subr.bf16.mxu0 0
    %453 = vmatpush1.bf16.msra.mxu0 0
    %454 = vmatprep.mubr.bf16.mxu0 0
    %455 = vmatmul.mubr.bf16.gmra.mrb[0].mxu0 %v420
    %v456 = vpop.f32.mrb[0].mxu0
    %v457 = vadd.f32 0.0, %v456
    %v458 = vpop.f32.mrb[0].mxu0
    %v459 = vpop.f32.mrb[0].mxu0
    %v460 = vpop.f32.mrb[0].mxu0
    %461 = vdwg.mxu0
    %v462 = vadd.f32 %v179, %v457
    %v463 = vtanh.pop %v462
    %v464 = vmul.f32 %v463, 0.5
    %v465 = vadd.f32 %v464, 0.5
    %v466 = vmul.f32 %v465, %v408
    %468 = vrot.lane.b32.xlu0 %v463, 64
    %v469 = vpop.permute.xlu0 %468
    %v471 = vmul.f32 %v465, %v469
    %473 = vrot.lane.b32.xlu0 %v471, 32
    %v474 = vpop.permute.xlu0 %473
    %v476 = vadd.f32 %v466, %v474
    %v477 = vtanh.pop %v476
    %479 = vrot.lane.b32.xlu0 %v477, 64
    %v480 = vpop.permute.xlu0 %479
    %v482 = vmul.f32 %v465, %v480
    %v483 = vpack.c.bf16 %v482, %v482
    %485 = vrot.lane.b32.xlu0 %v483, 32
    %v486 = vpop.permute.xlu0 %485
    %v488 = vsel %vm214, %v486, 0
    %490 = vmatprep.subr.bf16.mxu0 0
    %491 = vmatpush1.bf16.msra.mxu0 %v210
    %492 = vmatprep.subr.bf16.mxu0 0
    %493 = vmatpush1.bf16.msra.mxu0 %v211
    %494 = vmatprep.subr.bf16.mxu0 0
    %495 = vmatpush1.bf16.msra.mxu0 0
    %496 = vmatprep.subr.bf16.mxu0 0
    %497 = vmatpush1.bf16.msra.mxu0 0
    %498 = vmatprep.subr.bf16.mxu0 0
    %499 = vmatpush1.bf16.msra.mxu0 0
    %500 = vmatprep.subr.bf16.mxu0 0
    %501 = vmatpush1.bf16.msra.mxu0 0
    %502 = vmatprep.subr.bf16.mxu0 0
    %503 = vmatpush1.bf16.msra.mxu0 0
    %504 = vmatprep.subr.bf16.mxu0 0
    %505 = vmatpush1.bf16.msra.mxu0 0
    %506 = vmatprep.subr.bf16.mxu0 0
    %507 = vmatpush1.bf16.msra.mxu0 0
    %508 = vmatprep.subr.bf16.mxu0 0
    %509 = vmatpush1.bf16.msra.mxu0 0
    %510 = vmatprep.subr.bf16.mxu0 0
    %511 = vmatpush1.bf16.msra.mxu0 0
    %512 = vmatprep.subr.bf16.mxu0 0
    %513 = vmatpush1.bf16.msra.mxu0 0
    %514 = vmatprep.subr.bf16.mxu0 0
    %515 = vmatpush1.bf16.msra.mxu0 0
    %516 = vmatprep.subr.bf16.mxu0 0
    %517 = vmatpush1.bf16.msra.mxu0 0
    %518 = vmatprep.subr.bf16.mxu0 0
    %519 = vmatpush1.bf16.msra.mxu0 0
    %520 = vmatprep.subr.bf16.mxu0 0
    %521 = vmatpush1.bf16.msra.mxu0 0
    %522 = vmatprep.mubr.bf16.mxu0 0
    %523 = vmatmul.mubr.bf16.gmra.mrb[0].mxu0 %v488
    %v524 = vpop.f32.mrb[0].mxu0
    %v525 = vadd.f32 0.0, %v524
    %v526 = vpop.f32.mrb[0].mxu0
    %v527 = vpop.f32.mrb[0].mxu0
    %v528 = vpop.f32.mrb[0].mxu0
    %529 = vdwg.mxu0
    %v530 = vadd.f32 %v184, %v525
    %v531 = vtanh.pop %v530
    %v532 = vmul.f32 %v531, 0.5
    %v533 = vadd.f32 %v532, 0.5
    %v534 = vmul.f32 %v533, %v476
    %536 = vrot.lane.b32.xlu0 %v531, 64
    %v537 = vpop.permute.xlu0 %536
    %v539 = vmul.f32 %v533, %v537
    %541 = vrot.lane.b32.xlu0 %v539, 32
    %v542 = vpop.permute.xlu0 %541
    %v544 = vadd.f32 %v534, %v542
    %v545 = vtanh.pop %v544
    %547 = vrot.lane.b32.xlu0 %v545, 64
    %v548 = vpop.permute.xlu0 %547
    %v550 = vmul.f32 %v533, %v548
    %v551 = vpack.c.bf16 %v550, %v550
    %553 = vrot.lane.b32.xlu0 %v551, 32
    %v554 = vpop.permute.xlu0 %553
    %v556 = vsel %vm214, %v554, 0
    %558 = vmatprep.subr.bf16.mxu0 0
    %559 = vmatpush1.bf16.msra.mxu0 %v210
    %560 = vmatprep.subr.bf16.mxu0 0
    %561 = vmatpush1.bf16.msra.mxu0 %v211
    %562 = vmatprep.subr.bf16.mxu0 0
    %563 = vmatpush1.bf16.msra.mxu0 0
    %564 = vmatprep.subr.bf16.mxu0 0
    %565 = vmatpush1.bf16.msra.mxu0 0
    %566 = vmatprep.subr.bf16.mxu0 0
    %567 = vmatpush1.bf16.msra.mxu0 0
    %568 = vmatprep.subr.bf16.mxu0 0
    %569 = vmatpush1.bf16.msra.mxu0 0
    %570 = vmatprep.subr.bf16.mxu0 0
    %571 = vmatpush1.bf16.msra.mxu0 0
    %572 = vmatprep.subr.bf16.mxu0 0
    %573 = vmatpush1.bf16.msra.mxu0 0
    %574 = vmatprep.subr.bf16.mxu0 0
    %575 = vmatpush1.bf16.msra.mxu0 0
    %576 = vmatprep.subr.bf16.mxu0 0
    %577 = vmatpush1.bf16.msra.mxu0 0
    %578 = vmatprep.subr.bf16.mxu0 0
    %579 = vmatpush1.bf16.msra.mxu0 0
    %580 = vmatprep.subr.bf16.mxu0 0
    %581 = vmatpush1.bf16.msra.mxu0 0
    %582 = vmatprep.subr.bf16.mxu0 0
    %583 = vmatpush1.bf16.msra.mxu0 0
    %584 = vmatprep.subr.bf16.mxu0 0
    %585 = vmatpush1.bf16.msra.mxu0 0
    %586 = vmatprep.subr.bf16.mxu0 0
    %587 = vmatpush1.bf16.msra.mxu0 0
    %588 = vmatprep.subr.bf16.mxu0 0
    %589 = vmatpush1.bf16.msra.mxu0 0
    %590 = vmatprep.mubr.bf16.mxu0 0
    %591 = vmatmul.mubr.bf16.gmra.mrb[0].mxu0 %v556
    %v592 = vpop.f32.mrb[0].mxu0
    %v593 = vadd.f32 0.0, %v592
    %v594 = vpop.f32.mrb[0].mxu0
    %v595 = vpop.f32.mrb[0].mxu0
    %v596 = vpop.f32.mrb[0].mxu0
    %597 = vdwg.mxu0
    %v598 = vadd.f32 %v189, %v593
    %v599 = vtanh.pop %v598
    %v600 = vmul.f32 %v599, 0.5
    %v601 = vadd.f32 %v600, 0.5
    %v602 = vmul.f32 %v601, %v544
    %604 = vrot.lane.b32.xlu0 %v599, 64
    %v605 = vpop.permute.xlu0 %604
    %v607 = vmul.f32 %v601, %v605
    %609 = vrot.lane.b32.xlu0 %v607, 32
    %v610 = vpop.permute.xlu0 %609
    %v612 = vadd.f32 %v602, %v610
    %v613 = vtanh.pop %v612
    %615 = vrot.lane.b32.xlu0 %v613, 64
    %v616 = vpop.permute.xlu0 %615
    %v618 = vmul.f32 %v601, %v616
    %v619 = vpack.c.bf16 %v618, %v618
    %621 = vrot.lane.b32.xlu0 %v619, 32
    %v622 = vpop.permute.xlu0 %621
    %v624 = vsel %vm214, %v622, 0
    %626 = vmatprep.subr.bf16.mxu0 0
    %627 = vmatpush1.bf16.msra.mxu0 %v210
    %628 = vmatprep.subr.bf16.mxu0 0
    %629 = vmatpush1.bf16.msra.mxu0 %v211
    %630 = vmatprep.subr.bf16.mxu0 0
    %631 = vmatpush1.bf16.msra.mxu0 0
    %632 = vmatprep.subr.bf16.mxu0 0
    %633 = vmatpush1.bf16.msra.mxu0 0
    %634 = vmatprep.subr.bf16.mxu0 0
    %635 = vmatpush1.bf16.msra.mxu0 0
    %636 = vmatprep.subr.bf16.mxu0 0
    %637 = vmatpush1.bf16.msra.mxu0 0
    %638 = vmatprep.subr.bf16.mxu0 0
    %639 = vmatpush1.bf16.msra.mxu0 0
    %640 = vmatprep.subr.bf16.mxu0 0
    %641 = vmatpush1.bf16.msra.mxu0 0
    %642 = vmatprep.subr.bf16.mxu0 0
    %643 = vmatpush1.bf16.msra.mxu0 0
    %644 = vmatprep.subr.bf16.mxu0 0
    %645 = vmatpush1.bf16.msra.mxu0 0
    %646 = vmatprep.subr.bf16.mxu0 0
    %647 = vmatpush1.bf16.msra.mxu0 0
    %648 = vmatprep.subr.bf16.mxu0 0
    %649 = vmatpush1.bf16.msra.mxu0 0
    %650 = vmatprep.subr.bf16.mxu0 0
    %651 = vmatpush1.bf16.msra.mxu0 0
    %652 = vmatprep.subr.bf16.mxu0 0
    %653 = vmatpush1.bf16.msra.mxu0 0
    %654 = vmatprep.subr.bf16.mxu0 0
    %655 = vmatpush1.bf16.msra.mxu0 0
    %656 = vmatprep.subr.bf16.mxu0 0
    %657 = vmatpush1.bf16.msra.mxu0 0
    %658 = vmatprep.mubr.bf16.mxu0 0
    %659 = vmatmul.mubr.bf16.gmra.mrb[0].mxu0 %v624
    %v660 = vpop.f32.mrb[0].mxu0
    %v661 = vadd.f32 0.0, %v660
    %v662 = vpop.f32.mrb[0].mxu0
    %v663 = vpop.f32.mrb[0].mxu0
    %v664 = vpop.f32.mrb[0].mxu0
    %665 = vdwg.mxu0
    %v666 = vadd.f32 %v194, %v661
    %v667 = vtanh.pop %v666
    %v668 = vmul.f32 %v667, 0.5
    %v669 = vadd.f32 %v668, 0.5
    %v670 = vmul.f32 %v669, %v612
    %672 = vrot.lane.b32.xlu0 %v667, 64
    %v673 = vpop.permute.xlu0 %672
    %v675 = vmul.f32 %v669, %v673
    %677 = vrot.lane.b32.xlu0 %v675, 32
    %v678 = vpop.permute.xlu0 %677
    %v680 = vadd.f32 %v670, %v678
    %v681 = vtanh.pop %v680
    %683 = vrot.lane.b32.xlu0 %v681, 64
    %v684 = vpop.permute.xlu0 %683
    %v686 = vmul.f32 %v669, %v684
    %v687 = vpack.c.bf16 %v686, %v686
    %689 = vrot.lane.b32.xlu0 %v687, 32
    %v690 = vpop.permute.xlu0 %689
    %v692 = vsel %vm214, %v690, 0
    %694 = vmatprep.subr.bf16.mxu0 0
    %695 = vmatpush1.bf16.msra.mxu0 %v210
    %696 = vmatprep.subr.bf16.mxu0 0
    %697 = vmatpush1.bf16.msra.mxu0 %v211
    %698 = vmatprep.subr.bf16.mxu0 0
    %699 = vmatpush1.bf16.msra.mxu0 0
    %700 = vmatprep.subr.bf16.mxu0 0
    %701 = vmatpush1.bf16.msra.mxu0 0
    %702 = vmatprep.subr.bf16.mxu0 0
    %703 = vmatpush1.bf16.msra.mxu0 0
    %704 = vmatprep.subr.bf16.mxu0 0
    %705 = vmatpush1.bf16.msra.mxu0 0
    %706 = vmatprep.subr.bf16.mxu0 0
    %707 = vmatpush1.bf16.msra.mxu0 0
    %708 = vmatprep.subr.bf16.mxu0 0
    %709 = vmatpush1.bf16.msra.mxu0 0
    %710 = vmatprep.subr.bf16.mxu0 0
    %711 = vmatpush1.bf16.msra.mxu0 0
    %712 = vmatprep.subr.bf16.mxu0 0
    %713 = vmatpush1.bf16.msra.mxu0 0
    %714 = vmatprep.subr.bf16.mxu0 0
    %715 = vmatpush1.bf16.msra.mxu0 0
    %716 = vmatprep.subr.bf16.mxu0 0
    %717 = vmatpush1.bf16.msra.mxu0 0
    %718 = vmatprep.subr.bf16.mxu0 0
    %719 = vmatpush1.bf16.msra.mxu0 0
    %720 = vmatprep.subr.bf16.mxu0 0
    %721 = vmatpush1.bf16.msra.mxu0 0
    %722 = vmatprep.subr.bf16.mxu0 0
    %723 = vmatpush1.bf16.msra.mxu0 0
    %724 = vmatprep.subr.bf16.mxu0 0
    %725 = vmatpush1.bf16.msra.mxu0 0
    %726 = vmatprep.mubr.bf16.mxu0 0
    %727 = vmatmul.mubr.bf16.gmra.mrb[0].mxu0 %v692
    %v728 = vpop.f32.mrb[0].mxu0
    %v729 = vadd.f32 0.0, %v728
    %v730 = vpop.f32.mrb[0].mxu0
    %v731 = vpop.f32.mrb[0].mxu0
    %v732 = vpop.f32.mrb[0].mxu0
    %733 = vdwg.mxu0
    %v734 = vadd.f32 %v199, %v729
    %v735 = vtanh.pop %v734
    %v736 = vmul.f32 %v735, 0.5
    %v737 = vadd.f32 %v736, 0.5
    %v738 = vmul.f32 %v737, %v680
    %740 = vrot.lane.b32.xlu0 %v735, 64
    %v741 = vpop.permute.xlu0 %740
    %v743 = vmul.f32 %v737, %v741
    %745 = vrot.lane.b32.xlu0 %v743, 32
    %v746 = vpop.permute.xlu0 %745
    %v748 = vadd.f32 %v738, %v746
    %v749 = vtanh.pop %v748
    %751 = vrot.lane.b32.xlu0 %v749, 64
    %v752 = vpop.permute.xlu0 %751
    %v754 = vmul.f32 %v737, %v752
    %v755 = vld [vmem:[%s5] sm:$0xf]
    %v756 = vld [vmem:[%s5 + $0x4] sm:$0xf]
    %v757 = vld [vmem:[%s5 + $0x8] sm:$0xf]
    %v758 = vld [vmem:[%s5 + $0xc] sm:$0xf]
    %v759 = vld [vmem:[%s6] sm:$0xf]
    %v760 = vld [vmem:[%s6 + $0x4] sm:$0xf]
    %v761 = vld [vmem:[%s6 + $0x8] sm:$0xf]
    %v762 = vld [vmem:[%s6 + $0xc] sm:$0xf]
    %v763 = vld [vmem:[%s7] sm:$0x1]
    %v764 = vpack.c.bf16 %v346, %v278
    %v765 = vpack.c.bf16 %v482, %v414
    %v766 = vpack.c.bf16 %v618, %v550
    %v767 = vpack.c.bf16 %v754, %v686
    %v769 = vlaneseq
    %v770 = vshrl.u32 %v769, 7
    %v771 = vsub.s32 0, %v770
    %v772 = vrot.slane %v763, %v771
    %778 = vrot.lane.b32.xlu0 %v764, 32
    %v779 = vpop.permute.xlu0 %778
    %780 = vrot.lane.b32.xlu0 %v765, 32
    %v781 = vpop.permute.xlu0 %780
    %782 = vrot.lane.b32.xlu0 %v766, 32
    %v783 = vpop.permute.xlu0 %782
    %784 = vrot.lane.b32.xlu0 %v767, 32
    %v785 = vpop.permute.xlu0 %784
    %v790 = vunpack.c.l.b16 %v755
    %v791 = vunpack.c.l.b16 %v756
    %v792 = vunpack.c.l.b16 %v757
    %v793 = vunpack.c.l.b16 %v758
    %v794 = vpack.c.b16 %v791, %v790
    %v795 = vpack.c.b16 %v793, %v792
    %v799 = vsel %vm214, %v779, 0
    %v802 = vsel %vm214, %v781, 0
    %v805 = vsel %vm214, %v783, 0
    %v808 = vsel %vm214, %v785, 0
    %810 = vmatprep.subr.bf16.mxu0 0
    %811 = vmatpush1.bf16.msra.mxu0 %v794
    %812 = vmatprep.subr.bf16.mxu0 0
    %813 = vmatpush1.bf16.msra.mxu0 %v795
    %814 = vmatprep.subr.bf16.mxu0 0
    %815 = vmatpush1.bf16.msra.mxu0 0
    %816 = vmatprep.subr.bf16.mxu0 0
    %817 = vmatpush1.bf16.msra.mxu0 0
    %818 = vmatprep.subr.bf16.mxu0 0
    %819 = vmatpush1.bf16.msra.mxu0 0
    %820 = vmatprep.subr.bf16.mxu0 0
    %821 = vmatpush1.bf16.msra.mxu0 0
    %822 = vmatprep.subr.bf16.mxu0 0
    %823 = vmatpush1.bf16.msra.mxu0 0
    %824 = vmatprep.subr.bf16.mxu0 0
    %825 = vmatpush1.bf16.msra.mxu0 0
    %826 = vmatprep.subr.bf16.mxu0 0
    %827 = vmatpush1.bf16.msra.mxu0 0
    %828 = vmatprep.subr.bf16.mxu0 0
    %829 = vmatpush1.bf16.msra.mxu0 0
    %830 = vmatprep.subr.bf16.mxu0 0
    %831 = vmatpush1.bf16.msra.mxu0 0
    %832 = vmatprep.subr.bf16.mxu0 0
    %833 = vmatpush1.bf16.msra.mxu0 0
    %834 = vmatprep.subr.bf16.mxu0 0
    %835 = vmatpush1.bf16.msra.mxu0 0
    %836 = vmatprep.subr.bf16.mxu0 0
    %837 = vmatpush1.bf16.msra.mxu0 0
    %838 = vmatprep.subr.bf16.mxu0 0
    %839 = vmatpush1.bf16.msra.mxu0 0
    %840 = vmatprep.subr.bf16.mxu0 0
    %841 = vmatpush1.bf16.msra.mxu0 0
    %842 = vmatprep.mubr.bf16.mxu0 0
    %843 = vmatmul.mubr.bf16.gmra.mrb[0].mxu0 %v799
    %v844 = vpop.f32.mrb[0].mxu0
    %v845 = vadd.f32 %v772, %v844
    %v846 = vpop.f32.mrb[0].mxu0
    %v847 = vpop.f32.mrb[0].mxu0
    %v848 = vadd.f32 %v772, %v847
    %v849 = vpop.f32.mrb[0].mxu0
    %850 = vmatprep.mubr.bf16.mxu0 0
    %851 = vmatmul.mubr.bf16.gmra.mrb[0].mxu0 %v802
    %v852 = vpop.f32.mrb[0].mxu0
    %v853 = vadd.f32 %v772, %v852
    %v854 = vpop.f32.mrb[0].mxu0
    %v855 = vpop.f32.mrb[0].mxu0
    %v856 = vadd.f32 %v772, %v855
    %v857 = vpop.f32.mrb[0].mxu0
    %858 = vmatprep.mubr.bf16.mxu0 0
    %859 = vmatmul.mubr.bf16.gmra.mrb[0].mxu0 %v805
    %v860 = vpop.f32.mrb[0].mxu0
    %v861 = vadd.f32 %v772, %v860
    %v862 = vpop.f32.mrb[0].mxu0
    %v863 = vpop.f32.mrb[0].mxu0
    %v864 = vadd.f32 %v772, %v863
    %v865 = vpop.f32.mrb[0].mxu0
    %866 = vmatprep.mubr.bf16.mxu0 0
    %867 = vmatmul.mubr.bf16.gmra.mrb[0].mxu0 %v808
    %v868 = vpop.f32.mrb[0].mxu0
    %v869 = vadd.f32 %v772, %v868
    %v870 = vpop.f32.mrb[0].mxu0
    %v871 = vpop.f32.mrb[0].mxu0
    %v872 = vadd.f32 %v772, %v871
    %v873 = vpop.f32.mrb[0].mxu0
    %874 = vdwg.mxu0
    %v879 = vunpack.c.l.b16 %v759
    %v880 = vunpack.c.l.b16 %v760
    %v881 = vunpack.c.l.b16 %v761
    %v882 = vunpack.c.l.b16 %v762
    %v883 = vpack.c.b16 %v880, %v879
    %v884 = vpack.c.b16 %v882, %v881
    %887 = vmatprep.subr.bf16.mxu0 0
    %888 = vmatpush1.bf16.msra.mxu0 %v883
    %889 = vmatprep.subr.bf16.mxu0 0
    %890 = vmatpush1.bf16.msra.mxu0 %v884
    %891 = vmatprep.subr.bf16.mxu0 0
    %892 = vmatpush1.bf16.msra.mxu0 0
    %893 = vmatprep.subr.bf16.mxu0 0
    %894 = vmatpush1.bf16.msra.mxu0 0
    %895 = vmatprep.subr.bf16.mxu0 0
    %896 = vmatpush1.bf16.msra.mxu0 0
    %897 = vmatprep.subr.bf16.mxu0 0
    %898 = vmatpush1.bf16.msra.mxu0 0
    %899 = vmatprep.subr.bf16.mxu0 0
    %900 = vmatpush1.bf16.msra.mxu0 0
    %901 = vmatprep.subr.bf16.mxu0 0
    %902 = vmatpush1.bf16.msra.mxu0 0
    %903 = vmatprep.subr.bf16.mxu0 0
    %904 = vmatpush1.bf16.msra.mxu0 0
    %905 = vmatprep.subr.bf16.mxu0 0
    %906 = vmatpush1.bf16.msra.mxu0 0
    %907 = vmatprep.subr.bf16.mxu0 0
    %908 = vmatpush1.bf16.msra.mxu0 0
    %909 = vmatprep.subr.bf16.mxu0 0
    %910 = vmatpush1.bf16.msra.mxu0 0
    %911 = vmatprep.subr.bf16.mxu0 0
    %912 = vmatpush1.bf16.msra.mxu0 0
    %913 = vmatprep.subr.bf16.mxu0 0
    %914 = vmatpush1.bf16.msra.mxu0 0
    %915 = vmatprep.subr.bf16.mxu0 0
    %916 = vmatpush1.bf16.msra.mxu0 0
    %917 = vmatprep.subr.bf16.mxu0 0
    %918 = vmatpush1.bf16.msra.mxu0 0
    %919 = vmatprep.mubr.bf16.mxu0 0
    %920 = vmatmul.mubr.bf16.gmra.mrb[0].mxu0 %v216
    %v921 = vpop.f32.mrb[0].mxu0
    %v922 = vadd.f32 0.0, %v921
    %v923 = vpop.f32.mrb[0].mxu0
    %v924 = vpop.f32.mrb[0].mxu0
    %v925 = vpop.f32.mrb[0].mxu0
    %926 = vdwg.mxu0
    %v927 = vadd.f32 %v845, %v922
    %v928 = vtanh.pop %v927
    %v929 = vmul.f32 %v928, 0.5
    %v930 = vadd.f32 %v929, 0.5
    %v931 = vmul.f32 %v930, 0.0
    %933 = vrot.lane.b32.xlu0 %v928, 64
    %v934 = vpop.permute.xlu0 %933
    %v936 = vmul.f32 %v930, %v934
    %938 = vrot.lane.b32.xlu0 %v936, 32
    %v939 = vpop.permute.xlu0 %938
    %v941 = vadd.f32 %v931, %v939
    %v942 = vtanh.pop %v941
    %944 = vrot.lane.b32.xlu0 %v942, 64
    %v945 = vpop.permute.xlu0 %944
    %v947 = vmul.f32 %v930, %v945
    %v948 = vpack.c.bf16 %v947, %v947
    %950 = vrot.lane.b32.xlu0 %v948, 32
    %v951 = vpop.permute.xlu0 %950
    %v953 = vsel %vm214, %v951, 0
    %955 = vmatprep.subr.bf16.mxu0 0
    %956 = vmatpush1.bf16.msra.mxu0 %v883
    %957 = vmatprep.subr.bf16.mxu0 0
    %958 = vmatpush1.bf16.msra.mxu0 %v884
    %959 = vmatprep.subr.bf16.mxu0 0
    %960 = vmatpush1.bf16.msra.mxu0 0
    %961 = vmatprep.subr.bf16.mxu0 0
    %962 = vmatpush1.bf16.msra.mxu0 0
    %963 = vmatprep.subr.bf16.mxu0 0
    %964 = vmatpush1.bf16.msra.mxu0 0
    %965 = vmatprep.subr.bf16.mxu0 0
    %966 = vmatpush1.bf16.msra.mxu0 0
    %967 = vmatprep.subr.bf16.mxu0 0
    %968 = vmatpush1.bf16.msra.mxu0 0
    %969 = vmatprep.subr.bf16.mxu0 0
    %970 = vmatpush1.bf16.msra.mxu0 0
    %971 = vmatprep.subr.bf16.mxu0 0
    %972 = vmatpush1.bf16.msra.mxu0 0
    %973 = vmatprep.subr.bf16.mxu0 0
    %974 = vmatpush1.bf16.msra.mxu0 0
    %975 = vmatprep.subr.bf16.mxu0 0
    %976 = vmatpush1.bf16.msra.mxu0 0
    %977 = vmatprep.subr.bf16.mxu0 0
    %978 = vmatpush1.bf16.msra.mxu0 0
    %979 = vmatprep.subr.bf16.mxu0 0
    %980 = vmatpush1.bf16.msra.mxu0 0
    %981 = vmatprep.subr.bf16.mxu0 0
    %982 = vmatpush1.bf16.msra.mxu0 0
    %983 = vmatprep.subr.bf16.mxu0 0
    %984 = vmatpush1.bf16.msra.mxu0 0
    %985 = vmatprep.subr.bf16.mxu0 0
    %986 = vmatpush1.bf16.msra.mxu0 0
    %987 = vmatprep.mubr.bf16.mxu0 0
    %988 = vmatmul.mubr.bf16.gmra.mrb[0].mxu0 %v953
    %v989 = vpop.f32.mrb[0].mxu0
    %v990 = vadd.f32 0.0, %v989
    %v991 = vpop.f32.mrb[0].mxu0
    %v992 = vpop.f32.mrb[0].mxu0
    %v993 = vpop.f32.mrb[0].mxu0
    %994 = vdwg.mxu0
    %v995 = vadd.f32 %v848, %v990
    %v996 = vtanh.pop %v995
    %v997 = vmul.f32 %v996, 0.5
    %v998 = vadd.f32 %v997, 0.5
    %v999 = vmul.f32 %v998, %v941
    %1001 = vrot.lane.b32.xlu0 %v996, 64
    %v1002 = vpop.permute.xlu0 %1001
    %v1004 = vmul.f32 %v998, %v1002
    %1006 = vrot.lane.b32.xlu0 %v1004, 32
    %v1007 = vpop.permute.xlu0 %1006
    %v1009 = vadd.f32 %v999, %v1007
    %v1010 = vtanh.pop %v1009
    %1012 = vrot.lane.b32.xlu0 %v1010, 64
    %v1013 = vpop.permute.xlu0 %1012
    %v1015 = vmul.f32 %v998, %v1013
    %v1016 = vpack.c.bf16 %v1015, %v1015
    %1018 = vrot.lane.b32.xlu0 %v1016, 32
    %v1019 = vpop.permute.xlu0 %1018
    %v1021 = vsel %vm214, %v1019, 0
    %1023 = vmatprep.subr.bf16.mxu0 0
    %1024 = vmatpush1.bf16.msra.mxu0 %v883
    %1025 = vmatprep.subr.bf16.mxu0 0
    %1026 = vmatpush1.bf16.msra.mxu0 %v884
    %1027 = vmatprep.subr.bf16.mxu0 0
    %1028 = vmatpush1.bf16.msra.mxu0 0
    %1029 = vmatprep.subr.bf16.mxu0 0
    %1030 = vmatpush1.bf16.msra.mxu0 0
    %1031 = vmatprep.subr.bf16.mxu0 0
    %1032 = vmatpush1.bf16.msra.mxu0 0
    %1033 = vmatprep.subr.bf16.mxu0 0
    %1034 = vmatpush1.bf16.msra.mxu0 0
    %1035 = vmatprep.subr.bf16.mxu0 0
    %1036 = vmatpush1.bf16.msra.mxu0 0
    %1037 = vmatprep.subr.bf16.mxu0 0
    %1038 = vmatpush1.bf16.msra.mxu0 0
    %1039 = vmatprep.subr.bf16.mxu0 0
    %1040 = vmatpush1.bf16.msra.mxu0 0
    %1041 = vmatprep.subr.bf16.mxu0 0
    %1042 = vmatpush1.bf16.msra.mxu0 0
    %1043 = vmatprep.subr.bf16.mxu0 0
    %1044 = vmatpush1.bf16.msra.mxu0 0
    %1045 = vmatprep.subr.bf16.mxu0 0
    %1046 = vmatpush1.bf16.msra.mxu0 0
    %1047 = vmatprep.subr.bf16.mxu0 0
    %1048 = vmatpush1.bf16.msra.mxu0 0
    %1049 = vmatprep.subr.bf16.mxu0 0
    %1050 = vmatpush1.bf16.msra.mxu0 0
    %1051 = vmatprep.subr.bf16.mxu0 0
    %1052 = vmatpush1.bf16.msra.mxu0 0
    %1053 = vmatprep.subr.bf16.mxu0 0
    %1054 = vmatpush1.bf16.msra.mxu0 0
    %1055 = vmatprep.mubr.bf16.mxu0 0
    %1056 = vmatmul.mubr.bf16.gmra.mrb[0].mxu0 %v1021
    %v1057 = vpop.f32.mrb[0].mxu0
    %v1058 = vadd.f32 0.0, %v1057
    %v1059 = vpop.f32.mrb[0].mxu0
    %v1060 = vpop.f32.mrb[0].mxu0
    %v1061 = vpop.f32.mrb[0].mxu0
    %1062 = vdwg.mxu0
    %v1063 = vadd.f32 %v853, %v1058
    %v1064 = vtanh.pop %v1063
    %v1065 = vmul.f32 %v1064, 0.5
    %v1066 = vadd.f32 %v1065, 0.5
    %v1067 = vmul.f32 %v1066, %v1009
    %1069 = vrot.lane.b32.xlu0 %v1064, 64
    %v1070 = vpop.permute.xlu0 %1069
    %v1072 = vmul.f32 %v1066, %v1070
    %1074 = vrot.lane.b32.xlu0 %v1072, 32
    %v1075 = vpop.permute.xlu0 %1074
    %v1077 = vadd.f32 %v1067, %v1075
    %v1078 = vtanh.pop %v1077
    %1080 = vrot.lane.b32.xlu0 %v1078, 64
    %v1081 = vpop.permute.xlu0 %1080
    %v1083 = vmul.f32 %v1066, %v1081
    %v1084 = vpack.c.bf16 %v1083, %v1083
    %1086 = vrot.lane.b32.xlu0 %v1084, 32
    %v1087 = vpop.permute.xlu0 %1086
    %v1089 = vsel %vm214, %v1087, 0
    %1091 = vmatprep.subr.bf16.mxu0 0
    %1092 = vmatpush1.bf16.msra.mxu0 %v883
    %1093 = vmatprep.subr.bf16.mxu0 0
    %1094 = vmatpush1.bf16.msra.mxu0 %v884
    %1095 = vmatprep.subr.bf16.mxu0 0
    %1096 = vmatpush1.bf16.msra.mxu0 0
    %1097 = vmatprep.subr.bf16.mxu0 0
    %1098 = vmatpush1.bf16.msra.mxu0 0
    %1099 = vmatprep.subr.bf16.mxu0 0
    %1100 = vmatpush1.bf16.msra.mxu0 0
    %1101 = vmatprep.subr.bf16.mxu0 0
    %1102 = vmatpush1.bf16.msra.mxu0 0
    %1103 = vmatprep.subr.bf16.mxu0 0
    %1104 = vmatpush1.bf16.msra.mxu0 0
    %1105 = vmatprep.subr.bf16.mxu0 0
    %1106 = vmatpush1.bf16.msra.mxu0 0
    %1107 = vmatprep.subr.bf16.mxu0 0
    %1108 = vmatpush1.bf16.msra.mxu0 0
    %1109 = vmatprep.subr.bf16.mxu0 0
    %1110 = vmatpush1.bf16.msra.mxu0 0
    %1111 = vmatprep.subr.bf16.mxu0 0
    %1112 = vmatpush1.bf16.msra.mxu0 0
    %1113 = vmatprep.subr.bf16.mxu0 0
    %1114 = vmatpush1.bf16.msra.mxu0 0
    %1115 = vmatprep.subr.bf16.mxu0 0
    %1116 = vmatpush1.bf16.msra.mxu0 0
    %1117 = vmatprep.subr.bf16.mxu0 0
    %1118 = vmatpush1.bf16.msra.mxu0 0
    %1119 = vmatprep.subr.bf16.mxu0 0
    %1120 = vmatpush1.bf16.msra.mxu0 0
    %1121 = vmatprep.subr.bf16.mxu0 0
    %1122 = vmatpush1.bf16.msra.mxu0 0
    %1123 = vmatprep.mubr.bf16.mxu0 0
    %1124 = vmatmul.mubr.bf16.gmra.mrb[0].mxu0 %v1089
    %v1125 = vpop.f32.mrb[0].mxu0
    %v1126 = vadd.f32 0.0, %v1125
    %v1127 = vpop.f32.mrb[0].mxu0
    %v1128 = vpop.f32.mrb[0].mxu0
    %v1129 = vpop.f32.mrb[0].mxu0
    %1130 = vdwg.mxu0
    %v1131 = vadd.f32 %v856, %v1126
    %v1132 = vtanh.pop %v1131
    %v1133 = vmul.f32 %v1132, 0.5
    %v1134 = vadd.f32 %v1133, 0.5
    %v1135 = vmul.f32 %v1134, %v1077
    %1137 = vrot.lane.b32.xlu0 %v1132, 64
    %v1138 = vpop.permute.xlu0 %1137
    %v1140 = vmul.f32 %v1134, %v1138
    %1142 = vrot.lane.b32.xlu0 %v1140, 32
    %v1143 = vpop.permute.xlu0 %1142
    %v1145 = vadd.f32 %v1135, %v1143
    %v1146 = vtanh.pop %v1145
    %1148 = vrot.lane.b32.xlu0 %v1146, 64
    %v1149 = vpop.permute.xlu0 %1148
    %v1151 = vmul.f32 %v1134, %v1149
    %v1152 = vpack.c.bf16 %v1151, %v1151
    %1154 = vrot.lane.b32.xlu0 %v1152, 32
    %v1155 = vpop.permute.xlu0 %1154
    %v1157 = vsel %vm214, %v1155, 0
    %1159 = vmatprep.subr.bf16.mxu0 0
    %1160 = vmatpush1.bf16.msra.mxu0 %v883
    %1161 = vmatprep.subr.bf16.mxu0 0
    %1162 = vmatpush1.bf16.msra.mxu0 %v884
    %1163 = vmatprep.subr.bf16.mxu0 0
    %1164 = vmatpush1.bf16.msra.mxu0 0
    %1165 = vmatprep.subr.bf16.mxu0 0
    %1166 = vmatpush1.bf16.msra.mxu0 0
    %1167 = vmatprep.subr.bf16.mxu0 0
    %1168 = vmatpush1.bf16.msra.mxu0 0
    %1169 = vmatprep.subr.bf16.mxu0 0
    %1170 = vmatpush1.bf16.msra.mxu0 0
    %1171 = vmatprep.subr.bf16.mxu0 0
    %1172 = vmatpush1.bf16.msra.mxu0 0
    %1173 = vmatprep.subr.bf16.mxu0 0
    %1174 = vmatpush1.bf16.msra.mxu0 0
    %1175 = vmatprep.subr.bf16.mxu0 0
    %1176 = vmatpush1.bf16.msra.mxu0 0
    %1177 = vmatprep.subr.bf16.mxu0 0
    %1178 = vmatpush1.bf16.msra.mxu0 0
    %1179 = vmatprep.subr.bf16.mxu0 0
    %1180 = vmatpush1.bf16.msra.mxu0 0
    %1181 = vmatprep.subr.bf16.mxu0 0
    %1182 = vmatpush1.bf16.msra.mxu0 0
    %1183 = vmatprep.subr.bf16.mxu0 0
    %1184 = vmatpush1.bf16.msra.mxu0 0
    %1185 = vmatprep.subr.bf16.mxu0 0
    %1186 = vmatpush1.bf16.msra.mxu0 0
    %1187 = vmatprep.subr.bf16.mxu0 0
    %1188 = vmatpush1.bf16.msra.mxu0 0
    %1189 = vmatprep.subr.bf16.mxu0 0
    %1190 = vmatpush1.bf16.msra.mxu0 0
    %1191 = vmatprep.mubr.bf16.mxu0 0
    %1192 = vmatmul.mubr.bf16.gmra.mrb[0].mxu0 %v1157
    %v1193 = vpop.f32.mrb[0].mxu0
    %v1194 = vadd.f32 0.0, %v1193
    %v1195 = vpop.f32.mrb[0].mxu0
    %v1196 = vpop.f32.mrb[0].mxu0
    %v1197 = vpop.f32.mrb[0].mxu0
    %1198 = vdwg.mxu0
    %v1199 = vadd.f32 %v861, %v1194
    %v1200 = vtanh.pop %v1199
    %v1201 = vmul.f32 %v1200, 0.5
    %v1202 = vadd.f32 %v1201, 0.5
    %v1203 = vmul.f32 %v1202, %v1145
    %1205 = vrot.lane.b32.xlu0 %v1200, 64
    %v1206 = vpop.permute.xlu0 %1205
    %v1208 = vmul.f32 %v1202, %v1206
    %1210 = vrot.lane.b32.xlu0 %v1208, 32
    %v1211 = vpop.permute.xlu0 %1210
    %v1213 = vadd.f32 %v1203, %v1211
    %v1214 = vtanh.pop %v1213
    %1216 = vrot.lane.b32.xlu0 %v1214, 64
    %v1217 = vpop.permute.xlu0 %1216
    %v1219 = vmul.f32 %v1202, %v1217
    %v1220 = vpack.c.bf16 %v1219, %v1219
    %1222 = vrot.lane.b32.xlu0 %v1220, 32
    %v1223 = vpop.permute.xlu0 %1222
    %v1225 = vsel %vm214, %v1223, 0
    %1227 = vmatprep.subr.bf16.mxu0 0
    %1228 = vmatpush1.bf16.msra.mxu0 %v883
    %1229 = vmatprep.subr.bf16.mxu0 0
    %1230 = vmatpush1.bf16.msra.mxu0 %v884
    %1231 = vmatprep.subr.bf16.mxu0 0
    %1232 = vmatpush1.bf16.msra.mxu0 0
    %1233 = vmatprep.subr.bf16.mxu0 0
    %1234 = vmatpush1.bf16.msra.mxu0 0
    %1235 = vmatprep.subr.bf16.mxu0 0
    %1236 = vmatpush1.bf16.msra.mxu0 0
    %1237 = vmatprep.subr.bf16.mxu0 0
    %1238 = vmatpush1.bf16.msra.mxu0 0
    %1239 = vmatprep.subr.bf16.mxu0 0
    %1240 = vmatpush1.bf16.msra.mxu0 0
    %1241 = vmatprep.subr.bf16.mxu0 0
    %1242 = vmatpush1.bf16.msra.mxu0 0
    %1243 = vmatprep.subr.bf16.mxu0 0
    %1244 = vmatpush1.bf16.msra.mxu0 0
    %1245 = vmatprep.subr.bf16.mxu0 0
    %1246 = vmatpush1.bf16.msra.mxu0 0
    %1247 = vmatprep.subr.bf16.mxu0 0
    %1248 = vmatpush1.bf16.msra.mxu0 0
    %1249 = vmatprep.subr.bf16.mxu0 0
    %1250 = vmatpush1.bf16.msra.mxu0 0
    %1251 = vmatprep.subr.bf16.mxu0 0
    %1252 = vmatpush1.bf16.msra.mxu0 0
    %1253 = vmatprep.subr.bf16.mxu0 0
    %1254 = vmatpush1.bf16.msra.mxu0 0
    %1255 = vmatprep.subr.bf16.mxu0 0
    %1256 = vmatpush1.bf16.msra.mxu0 0
    %1257 = vmatprep.subr.bf16.mxu0 0
    %1258 = vmatpush1.bf16.msra.mxu0 0
    %1259 = vmatprep.mubr.bf16.mxu0 0
    %1260 = vmatmul.mubr.bf16.gmra.mrb[0].mxu0 %v1225
    %v1261 = vpop.f32.mrb[0].mxu0
    %v1262 = vadd.f32 0.0, %v1261
    %v1263 = vpop.f32.mrb[0].mxu0
    %v1264 = vpop.f32.mrb[0].mxu0
    %v1265 = vpop.f32.mrb[0].mxu0
    %1266 = vdwg.mxu0
    %v1267 = vadd.f32 %v864, %v1262
    %v1268 = vtanh.pop %v1267
    %v1269 = vmul.f32 %v1268, 0.5
    %v1270 = vadd.f32 %v1269, 0.5
    %v1271 = vmul.f32 %v1270, %v1213
    %1273 = vrot.lane.b32.xlu0 %v1268, 64
    %v1274 = vpop.permute.xlu0 %1273
    %v1276 = vmul.f32 %v1270, %v1274
    %1278 = vrot.lane.b32.xlu0 %v1276, 32
    %v1279 = vpop.permute.xlu0 %1278
    %v1281 = vadd.f32 %v1271, %v1279
    %v1282 = vtanh.pop %v1281
    %1284 = vrot.lane.b32.xlu0 %v1282, 64
    %v1285 = vpop.permute.xlu0 %1284
    %v1287 = vmul.f32 %v1270, %v1285
    %v1288 = vpack.c.bf16 %v1287, %v1287
    %1290 = vrot.lane.b32.xlu0 %v1288, 32
    %v1291 = vpop.permute.xlu0 %1290
    %v1293 = vsel %vm214, %v1291, 0
    %1295 = vmatprep.subr.bf16.mxu0 0
    %1296 = vmatpush1.bf16.msra.mxu0 %v883
    %1297 = vmatprep.subr.bf16.mxu0 0
    %1298 = vmatpush1.bf16.msra.mxu0 %v884
    %1299 = vmatprep.subr.bf16.mxu0 0
    %1300 = vmatpush1.bf16.msra.mxu0 0
    %1301 = vmatprep.subr.bf16.mxu0 0
    %1302 = vmatpush1.bf16.msra.mxu0 0
    %1303 = vmatprep.subr.bf16.mxu0 0
    %1304 = vmatpush1.bf16.msra.mxu0 0
    %1305 = vmatprep.subr.bf16.mxu0 0
    %1306 = vmatpush1.bf16.msra.mxu0 0
    %1307 = vmatprep.subr.bf16.mxu0 0
    %1308 = vmatpush1.bf16.msra.mxu0 0
    %1309 = vmatprep.subr.bf16.mxu0 0
    %1310 = vmatpush1.bf16.msra.mxu0 0
    %1311 = vmatprep.subr.bf16.mxu0 0
    %1312 = vmatpush1.bf16.msra.mxu0 0
    %1313 = vmatprep.subr.bf16.mxu0 0
    %1314 = vmatpush1.bf16.msra.mxu0 0
    %1315 = vmatprep.subr.bf16.mxu0 0
    %1316 = vmatpush1.bf16.msra.mxu0 0
    %1317 = vmatprep.subr.bf16.mxu0 0
    %1318 = vmatpush1.bf16.msra.mxu0 0
    %1319 = vmatprep.subr.bf16.mxu0 0
    %1320 = vmatpush1.bf16.msra.mxu0 0
    %1321 = vmatprep.subr.bf16.mxu0 0
    %1322 = vmatpush1.bf16.msra.mxu0 0
    %1323 = vmatprep.subr.bf16.mxu0 0
    %1324 = vmatpush1.bf16.msra.mxu0 0
    %1325 = vmatprep.subr.bf16.mxu0 0
    %1326 = vmatpush1.bf16.msra.mxu0 0
    %1327 = vmatprep.mubr.bf16.mxu0 0
    %1328 = vmatmul.mubr.bf16.gmra.mrb[0].mxu0 %v1293
    %v1329 = vpop.f32.mrb[0].mxu0
    %v1330 = vadd.f32 0.0, %v1329
    %v1331 = vpop.f32.mrb[0].mxu0
    %v1332 = vpop.f32.mrb[0].mxu0
    %v1333 = vpop.f32.mrb[0].mxu0
    %1334 = vdwg.mxu0
    %v1335 = vadd.f32 %v869, %v1330
    %v1336 = vtanh.pop %v1335
    %v1337 = vmul.f32 %v1336, 0.5
    %v1338 = vadd.f32 %v1337, 0.5
    %v1339 = vmul.f32 %v1338, %v1281
    %1341 = vrot.lane.b32.xlu0 %v1336, 64
    %v1342 = vpop.permute.xlu0 %1341
    %v1344 = vmul.f32 %v1338, %v1342
    %1346 = vrot.lane.b32.xlu0 %v1344, 32
    %v1347 = vpop.permute.xlu0 %1346
    %v1349 = vadd.f32 %v1339, %v1347
    %v1350 = vtanh.pop %v1349
    %1352 = vrot.lane.b32.xlu0 %v1350, 64
    %v1353 = vpop.permute.xlu0 %1352
    %v1355 = vmul.f32 %v1338, %v1353
    %v1356 = vpack.c.bf16 %v1355, %v1355
    %1358 = vrot.lane.b32.xlu0 %v1356, 32
    %v1359 = vpop.permute.xlu0 %1358
    %v1361 = vsel %vm214, %v1359, 0
    %1363 = vmatprep.subr.bf16.mxu0 0
    %1364 = vmatpush1.bf16.msra.mxu0 %v883
    %1365 = vmatprep.subr.bf16.mxu0 0
    %1366 = vmatpush1.bf16.msra.mxu0 %v884
    %1367 = vmatprep.subr.bf16.mxu0 0
    %1368 = vmatpush1.bf16.msra.mxu0 0
    %1369 = vmatprep.subr.bf16.mxu0 0
    %1370 = vmatpush1.bf16.msra.mxu0 0
    %1371 = vmatprep.subr.bf16.mxu0 0
    %1372 = vmatpush1.bf16.msra.mxu0 0
    %1373 = vmatprep.subr.bf16.mxu0 0
    %1374 = vmatpush1.bf16.msra.mxu0 0
    %1375 = vmatprep.subr.bf16.mxu0 0
    %1376 = vmatpush1.bf16.msra.mxu0 0
    %1377 = vmatprep.subr.bf16.mxu0 0
    %1378 = vmatpush1.bf16.msra.mxu0 0
    %1379 = vmatprep.subr.bf16.mxu0 0
    %1380 = vmatpush1.bf16.msra.mxu0 0
    %1381 = vmatprep.subr.bf16.mxu0 0
    %1382 = vmatpush1.bf16.msra.mxu0 0
    %1383 = vmatprep.subr.bf16.mxu0 0
    %1384 = vmatpush1.bf16.msra.mxu0 0
    %1385 = vmatprep.subr.bf16.mxu0 0
    %1386 = vmatpush1.bf16.msra.mxu0 0
    %1387 = vmatprep.subr.bf16.mxu0 0
    %1388 = vmatpush1.bf16.msra.mxu0 0
    %1389 = vmatprep.subr.bf16.mxu0 0
    %1390 = vmatpush1.bf16.msra.mxu0 0
    %1391 = vmatprep.subr.bf16.mxu0 0
    %1392 = vmatpush1.bf16.msra.mxu0 0
    %1393 = vmatprep.subr.bf16.mxu0 0
    %1394 = vmatpush1.bf16.msra.mxu0 0
    %1395 = vmatprep.mubr.bf16.mxu0 0
    %1396 = vmatmul.mubr.bf16.gmra.mrb[0].mxu0 %v1361
    %v1397 = vpop.f32.mrb[0].mxu0
    %v1398 = vadd.f32 0.0, %v1397
    %v1399 = vpop.f32.mrb[0].mxu0
    %v1400 = vpop.f32.mrb[0].mxu0
    %v1401 = vpop.f32.mrb[0].mxu0
    %1402 = vdwg.mxu0
    %v1403 = vadd.f32 %v872, %v1398
    %v1404 = vtanh.pop %v1403
    %v1405 = vmul.f32 %v1404, 0.5
    %v1406 = vadd.f32 %v1405, 0.5
    %v1407 = vmul.f32 %v1406, %v1349
    %1409 = vrot.lane.b32.xlu0 %v1404, 64
    %v1410 = vpop.permute.xlu0 %1409
    %v1412 = vmul.f32 %v1406, %v1410
    %1414 = vrot.lane.b32.xlu0 %v1412, 32
    %v1415 = vpop.permute.xlu0 %1414
    %v1417 = vadd.f32 %v1407, %v1415
    %v1418 = vtanh.pop %v1417
    %1420 = vrot.lane.b32.xlu0 %v1418, 64
    %v1421 = vpop.permute.xlu0 %1420
    %v1423 = vmul.f32 %v1406, %v1421
    %v1424 = vpack.c.bf16 %v1423, %v1423
    %v1425 = vld [vmem:[%s8] sm:$0xf]
    %v1426 = vld [vmem:[%s8 + $0x4] sm:$0xf]
    %v1427 = vld [vmem:[%s8 + $0x8] sm:$0xf]
    %v1428 = vld [vmem:[%s8 + $0xc] sm:$0xf]
    %v1429 = vld [vmem:[%s10] sm:$0x1]
    %v1431 = vlaneseq
    %v1432 = vshrl.u32 %v1431, 7
    %v1433 = vsub.s32 0, %v1432
    %v1434 = vrot.slane %v1429, %v1433
    %1437 = vrot.lane.b32.xlu0 %v1424, 32
    %v1438 = vpop.permute.xlu0 %1437
    %v1443 = vunpack.c.l.b16 %v1425
    %v1444 = vunpack.c.l.b16 %v1426
    %v1445 = vunpack.c.l.b16 %v1427
    %v1446 = vunpack.c.l.b16 %v1428
    %v1447 = vpack.c.b16 %v1444, %v1443
    %v1448 = vpack.c.b16 %v1446, %v1445
    %v1452 = vsel %vm214, %v1438, 0
    %1454 = vmatprep.subr.bf16.mxu0 0
    %1455 = vmatpush1.bf16.msra.mxu0 %v1447
    %1456 = vmatprep.subr.bf16.mxu0 0
    %1457 = vmatpush1.bf16.msra.mxu0 %v1448
    %1458 = vmatprep.subr.bf16.mxu0 0
    %1459 = vmatpush1.bf16.msra.mxu0 0
    %1460 = vmatprep.subr.bf16.mxu0 0
    %1461 = vmatpush1.bf16.msra.mxu0 0
    %1462 = vmatprep.subr.bf16.mxu0 0
    %1463 = vmatpush1.bf16.msra.mxu0 0
    %1464 = vmatprep.subr.bf16.mxu0 0
    %1465 = vmatpush1.bf16.msra.mxu0 0
    %1466 = vmatprep.subr.bf16.mxu0 0
    %1467 = vmatpush1.bf16.msra.mxu0 0
    %1468 = vmatprep.subr.bf16.mxu0 0
    %1469 = vmatpush1.bf16.msra.mxu0 0
    %1470 = vmatprep.subr.bf16.mxu0 0
    %1471 = vmatpush1.bf16.msra.mxu0 0
    %1472 = vmatprep.subr.bf16.mxu0 0
    %1473 = vmatpush1.bf16.msra.mxu0 0
    %1474 = vmatprep.subr.bf16.mxu0 0
    %1475 = vmatpush1.bf16.msra.mxu0 0
    %1476 = vmatprep.subr.bf16.mxu0 0
    %1477 = vmatpush1.bf16.msra.mxu0 0
    %1478 = vmatprep.subr.bf16.mxu0 0
    %1479 = vmatpush1.bf16.msra.mxu0 0
    %1480 = vmatprep.subr.bf16.mxu0 0
    %1481 = vmatpush1.bf16.msra.mxu0 0
    %1482 = vmatprep.subr.bf16.mxu0 0
    %1483 = vmatpush1.bf16.msra.mxu0 0
    %1484 = vmatprep.subr.bf16.mxu0 0
    %1485 = vmatpush1.bf16.msra.mxu0 0
    %1486 = vmatprep.mubr.bf16.mxu0 0
    %1487 = vmatmul.mubr.bf16.gmra.mrb[0].mxu0 %v1452
    %v1488 = vpop.f32.mrb[0].mxu0
    %v1489 = vadd.f32 %v1434, %v1488
    %v1490 = vpop.f32.mrb[0].mxu0
    %v1491 = vpop.f32.mrb[0].mxu0
    %v1492 = vpop.f32.mrb[0].mxu0
    %1493 = vdwg.mxu0
    %v1494 = vld [vmem:[%s1] sm:$0xff]
    %v1495 = vld [vmem:[%s9] sm:$0x7]
    %1497 = vset.pattern.permute.xlu0 0
    %1498 = vperm.xlu0 %1497, %v1494
    %v1499 = vpop.permute.xlu0 %1498
    %v1501 = vlaneseq
    %v1502 = vshrl.u32 %v1501, 7
    %v1503 = vsub.s32 0, %v1502
    %v1504 = vrot.slane %v1495, %v1503
    %v1505 = vmul.f32 %v1499, %v1504
    %v1506 = vadd.f32 %v1489, %v1505
    %1507 = vset.pattern.permute.xlu0 1
    %1508 = vperm.xlu0 %1507, %v1494
    %v1509 = vpop.permute.xlu0 %1508
    %v1511 = vlaneseq
    %v1512 = vshrl.u32 %v1511, 7
    %v1513 = vsub.s32 1, %v1512
    %v1514 = vrot.slane %v1495, %v1513
    %v1515 = vmul.f32 %v1509, %v1514
    %v1516 = vadd.f32 %v1506, %v1515
    %1517 = vset.pattern.permute.xlu0 2
    %1518 = vperm.xlu0 %1517, %v1494
    %v1519 = vpop.permute.xlu0 %1518
    %v1521 = vlaneseq
    %v1522 = vshrl.u32 %v1521, 7
    %v1523 = vsub.s32 2, %v1522
    %v1524 = vrot.slane %v1495, %v1523
    %v1525 = vmul.f32 %v1519, %v1524
    %v1526 = vadd.f32 %v1516, %v1525
    %1527 = vst [vmem:[#allocation5] sm:$0xff] %v1526
    // Predicated region
    $region50: #{tpu_custom_call.1} parent=1 // pred_check
      _
    $region51: #{tpu_custom_call.1} parent=1 // pred_check_branch
      %1529 = sbr.rel (0) target = $region53
    $region52: #{tpu_custom_call.1} parent=1 // pred_region
      %s1531 = ssub.s32 128, 128
      %1532 = vsyncadd [#allocation4], %s1531
      %s1534 = sshll.u32 [#allocation5], 4
      %s1535 = int_to_ptr.vmem [resolvable:$true] %s1534
      %1537 = dma.vmem_to_hbm [thread:$0]  %s1535, 128, %s11, [#allocation4]
    $region53: #{tpu_custom_call.1} parent=1 // pred_fallthru
      _
    // Predicated region
    $region54: #{tpu_custom_call.1} parent=1 // pred_check
      _
    $region55: #{tpu_custom_call.1} parent=1 // pred_check_branch
      %1539 = sbr.rel (0) target = $region57
    $region56: #{tpu_custom_call.1} parent=1 // pred_region
      %1540 = dma.done [#allocation4], 128
    $region57: #{tpu_custom_call.1} parent=1 // pred_fallthru
      _
    %1541 = vsyncpa [#allocation3], 1
    %1542 = vsyncpa [#allocation4], 1

</llo_original>
